<compile_context>
chip_gen: v5e
topology: v5e:2x2
jax: 0.10.0
libtpu: 0.0.40
codegen_flags: <defaults>
</compile_context>

<pallas_src>
import math

import jax
import jax.numpy as jnp
from jax.experimental import pallas as pl
from jax.experimental.pallas import tpu as pltpu

# ---- problem sizes (small, consistent with the module) ----
B = 2                 # batch
N = 16                # tokens (sequence length)
C = 32                # embedding dim
NUM_HEADS = 4
HD = C // NUM_HEADS   # head dim = 8
M = B * N             # flattened tokens = 32
G = NUM_HEADS * B     # fused (head, batch) attention groups = 8
SCALE = HD ** (-0.5)
MLP_RATIO = 4.0
HMLP = int(C * MLP_RATIO)   # mlp hidden = 128
EPS = 1e-5                  # nn.LayerNorm default


def _layernorm(x, gamma, beta):
    mean = jnp.mean(x, axis=-1, keepdims=True)
    var = jnp.mean((x - mean) ** 2, axis=-1, keepdims=True)
    return (x - mean) * jax.lax.rsqrt(var + EPS) * gamma + beta


def _gelu_exact(x):
    # PyTorch nn.GELU() default = exact erf formulation
    return 0.5 * x * (1.0 + jax.lax.erf(x * (1.0 / math.sqrt(2.0))))


def transformer_block_kernel(
    x_ref,                 # (M, C)     tokens, batch flattened into rows
    g1_ref, b1_ref,        # (1, C)     norm1 gamma/beta
    a_ref,                 # (H, C, C)  scale * Wq_h @ Wk_h^T
    vp_ref,                # (H, C, C)  Wv_h @ Wproj_h
    bproj_ref,             # (1, C)
    g2_ref, b2_ref,        # (1, C)     norm2 gamma/beta
    w1_ref, bm1_ref,       # (C, HMLP), (1, HMLP)
    w2_ref, bm2_ref,       # (HMLP, C), (1, C)
    o_ref,                 # (M, C)
):
    x = x_ref[...]                                           # (M, C)

    # ---------- attention branch (pre-norm) ----------
    xn = _layernorm(x, g1_ref[...], b1_ref[...])             # (M, C)

    # one broadcast over heads; heads stay on the leading (batch) einsum axis
    xn_h = jnp.broadcast_to(xn[None], (NUM_HEADS, M, C))     # (H, M, C)

    # "query side" t = scale * xn (Wq Wk^T) and fused value*proj u = xn (Wv Wproj)
    t_h = jnp.einsum("hmc,hce->hme", xn_h, a_ref[...],
                     preferred_element_type=jnp.float32)     # (H, M, C)
    u_h = jnp.einsum("hmc,hce->hme", xn_h, vp_ref[...],
                     preferred_element_type=jnp.float32)     # (H, M, C)

    # (H, B*N, C) -> (H*B, N, C): tile-granular reshape, groups ordered (head, batch)
    t_g = t_h.reshape(G, N, C)
    u_g = u_h.reshape(G, N, C)
    xn_g = xn_h.reshape(G, N, C)

    # scores per (head, batch) group: s[g, i, j] = scale * q_i . k_j
    s = jnp.einsum("gic,gjc->gij", t_g, xn_g,
                   preferred_element_type=jnp.float32)       # (G, N, N)
    s = s - jnp.max(s, axis=-1, keepdims=True)
    p = jnp.exp(s)
    p = p * pl.reciprocal(jnp.sum(p, axis=-1, keepdims=True), approx=True)

    # ctx[g] = softmax(s) @ (V_h Wproj_h)  -- already in full C-space per head
    ctx = jnp.einsum("gik,gkc->gic", p, u_g,
                     preferred_element_type=jnp.float32)     # (G, N, C)

    # sum per-head contributions and add projection bias
    proj = ctx.reshape(NUM_HEADS, M, C).sum(axis=0) + bproj_ref[...]   # (M, C)
    x1 = x + proj                                            # residual 1

    # ---------- MLP branch (pre-norm) ----------
    xn2 = _layernorm(x1, g2_ref[...], b2_ref[...])
    h1 = jnp.dot(xn2, w1_ref[...],
                 preferred_element_type=jnp.float32) + bm1_ref[...]    # (M, HMLP)
    h1 = _gelu_exact(h1)
    h2 = jnp.dot(h1, w2_ref[...],
                 preferred_element_type=jnp.float32) + bm2_ref[...]    # (M, C)

    o_ref[...] = x1 + h2                                     # residual 2


def _prepare_attention_weights(wqkv, wproj):
    """Fold per-head Q/K and V/proj weight pairs into (H, C, C) matrices.

    qkv Linear columns are ordered [3, head, head_dim] (matching the PyTorch
    reshape(B, N, 3, H, HD)); slicing heads here is wrapper-side plumbing only.
    """
    w3 = wqkv.reshape(C, 3, NUM_HEADS, HD).transpose(1, 2, 0, 3)       # (3, H, C, HD)
    wq_h, wk_h, wv_h = w3[0], w3[1], w3[2]                             # (H, C, HD)
    wproj_h = wproj.reshape(NUM_HEADS, HD, C)                          # (H, HD, C)
    hi = jax.lax.Precision.HIGHEST
    a_h = SCALE * jnp.einsum("hcd,hed->hce", wq_h, wk_h, precision=hi)  # (H, C, C)
    vp_h = jnp.einsum("hcd,hde->hce", wv_h, wproj_h, precision=hi)      # (H, C, C)
    return a_h, vp_h


@jax.jit
def transformer_block(x, params):
    """x: (B, N, C) float32. params: raw module weights (see init_params)."""
    a_h, vp_h = _prepare_attention_weights(params["wqkv"], params["wproj"])
    x_flat = x.reshape(M, C)        # collapse batch into sublanes; single kernel call

    vmem = pltpu.MemorySpace.VMEM
    out_flat = pl.pallas_call(
        transformer_block_kernel,
        out_shape=jax.ShapeDtypeStruct((M, C), jnp.float32),
        in_specs=[pl.BlockSpec(memory_space=vmem)] * 12,
        out_specs=pl.BlockSpec(memory_space=vmem),
    )(x_flat, params["g1"], params["b1"], a_h, vp_h, params["bproj"],
      params["g2"], params["b2"], params["w1"], params["bm1"],
      params["w2"], params["bm2"])
    return out_flat.reshape(B, N, C)


def init_params(key):
    ks = jax.random.split(key, 8)
    return {
        # norm1
        "g1": 1.0 + 0.01 * jax.random.normal(ks[0], (1, C), jnp.float32),
        "b1": 0.01 * jax.random.normal(ks[1], (1, C), jnp.float32),
        # attention (qkv_bias=False)
        "wqkv": 0.05 * jax.random.normal(ks[2], (C, 3 * C), jnp.float32),
        "wproj": 0.05 * jax.random.normal(ks[3], (C, C), jnp.float32),
        "bproj": 0.01 * jax.random.normal(ks[4], (1, C), jnp.float32),
        # norm2
        "g2": 1.0 + 0.01 * jax.random.normal(ks[5], (1, C), jnp.float32),
        "b2": 0.01 * jax.random.normal(ks[6], (1, C), jnp.float32),
        # mlp
        "w1": 0.05 * jax.random.normal(ks[7], (C, HMLP), jnp.float32),
        "bm1": jnp.zeros((1, HMLP), jnp.float32),
        "w2": 0.05 * jax.random.normal(jax.random.fold_in(key, 99), (HMLP, C), jnp.float32),
        "bm2": jnp.zeros((1, C), jnp.float32),
    }


def reference(x, p):
    """Pure-JAX reference mirroring the PyTorch forward (eval mode)."""
    def ln(t, g, b):
        m = jnp.mean(t, axis=-1, keepdims=True)
        v = jnp.mean((t - m) ** 2, axis=-1, keepdims=True)
        return (t - m) / jnp.sqrt(v + EPS) * g + b

    xn = ln(x, p["g1"], p["b1"])
    qkv = xn @ p["wqkv"]                                  # (B, N, 3C)
    qkv = qkv.reshape(B, N, 3, NUM_HEADS, HD).transpose(2, 0, 3, 1, 4)
    q, k, v = qkv[0], qkv[1], qkv[2]                      # (B, h, N, hd)
    attn = jnp.einsum("bhqd,bhkd->bhqk", q, k) * SCALE
    attn = jax.nn.softmax(attn, axis=-1)
    out = jnp.einsum("bhqk,bhkd->bhqd", attn, v)
    out = out.transpose(0, 2, 1, 3).reshape(B, N, C)
    x1 = x + (out @ p["wproj"] + p["bproj"])

    xn2 = ln(x1, p["g2"], p["b2"])
    h1 = jax.nn.gelu(xn2 @ p["w1"] + p["bm1"], approximate=False)
    h2 = h1 @ p["w2"] + p["bm2"]
    return x1 + h2


if __name__ == "__main__":
    key = jax.random.PRNGKey(0)
    kx, kp = jax.random.split(key)
    x = jax.random.normal(kx, (B, N, C), jnp.float32)
    params = init_params(kp)

    out = jax.block_until_ready(transformer_block(x, params))

    with jax.default_matmul_precision("highest"):
        ref = jax.block_until_ready(reference(x, params))

    assert out.shape == (B, N, C)
    max_err = float(jnp.max(jnp.abs(out - ref)))
    # approx reciprocal in softmax + MXU f32 (bf16-pass) accumulation => loose-ish bound
    assert max_err < 2e-3, f"max abs diff {max_err}"
    print("KERNEL_OK")
</pallas_src>

<mosaic_0001>
module attributes {stable_mosaic.version = 11 : i64} {
  func.func @transformer_block_kernel(%arg0: memref<32x32xf32, #tpu.memory_space<vmem>>, %arg1: memref<1x32xf32, #tpu.memory_space<vmem>>, %arg2: memref<1x32xf32, #tpu.memory_space<vmem>>, %arg3: memref<4x32x32xf32, #tpu.memory_space<vmem>>, %arg4: memref<4x32x32xf32, #tpu.memory_space<vmem>>, %arg5: memref<1x32xf32, #tpu.memory_space<vmem>>, %arg6: memref<1x32xf32, #tpu.memory_space<vmem>>, %arg7: memref<1x32xf32, #tpu.memory_space<vmem>>, %arg8: memref<32x128xf32, #tpu.memory_space<vmem>>, %arg9: memref<1x128xf32, #tpu.memory_space<vmem>>, %arg10: memref<128x32xf32, #tpu.memory_space<vmem>>, %arg11: memref<1x32xf32, #tpu.memory_space<vmem>>, %arg12: memref<32x32xf32, #tpu.memory_space<vmem>>) attributes {dimension_semantics = [], scalar_prefetch = 0 : i64, scratch_operands = 0 : i64, tpu.core_type = #tpu.core_type<tc>} {
    %c0 = arith.constant 0 : index
    %c0_0 = arith.constant 0 : index
    %0 = vector.load %arg0[%c0, %c0_0] : memref<32x32xf32, #tpu.memory_space<vmem>>, vector<32x32xf32>
    %c0_1 = arith.constant 0 : index
    %c0_2 = arith.constant 0 : index
    %1 = vector.load %arg1[%c0_1, %c0_2] : memref<1x32xf32, #tpu.memory_space<vmem>>, vector<1x32xf32>
    %c0_3 = arith.constant 0 : index
    %c0_4 = arith.constant 0 : index
    %2 = vector.load %arg2[%c0_3, %c0_4] : memref<1x32xf32, #tpu.memory_space<vmem>>, vector<1x32xf32>
    %cst = arith.constant dense<0.000000e+00> : vector<32xf32>
    %3 = vector.multi_reduction <add>, %0, %cst [1] : vector<32x32xf32> to vector<32xf32>
    %4 = vector.shape_cast %3 : vector<32xf32> to vector<32x1xf32>
    %cst_5 = arith.constant 3.200000e+01 : f32
    %5 = vector.broadcast %cst_5 : f32 to vector<32x1xf32>
    %6 = arith.divf %4, %5 : vector<32x1xf32>
    %7 = vector.broadcast %6 : vector<32x1xf32> to vector<32x32xf32>
    %8 = arith.subf %0, %7 : vector<32x32xf32>
    %9 = arith.mulf %8, %8 : vector<32x32xf32>
    %cst_6 = arith.constant dense<0.000000e+00> : vector<32xf32>
    %10 = vector.multi_reduction <add>, %9, %cst_6 [1] : vector<32x32xf32> to vector<32xf32>
    %11 = vector.shape_cast %10 : vector<32xf32> to vector<32x1xf32>
    %cst_7 = arith.constant 3.200000e+01 : f32
    %12 = vector.broadcast %cst_7 : f32 to vector<32x1xf32>
    %13 = arith.divf %11, %12 : vector<32x1xf32>
    %14 = vector.broadcast %6 : vector<32x1xf32> to vector<32x32xf32>
    %15 = arith.subf %0, %14 : vector<32x32xf32>
    %cst_8 = arith.constant 9.99999974E-6 : f32
    %16 = vector.broadcast %cst_8 : f32 to vector<32x1xf32>
    %17 = arith.addf %13, %16 : vector<32x1xf32>
    %18 = math.rsqrt %17 : vector<32x1xf32>
    %19 = vector.broadcast %18 : vector<32x1xf32> to vector<32x32xf32>
    %20 = arith.mulf %15, %19 : vector<32x32xf32>
    %21 = vector.broadcast %1 : vector<1x32xf32> to vector<32x32xf32>
    %22 = arith.mulf %20, %21 : vector<32x32xf32>
    %23 = vector.broadcast %2 : vector<1x32xf32> to vector<32x32xf32>
    %24 = arith.addf %22, %23 : vector<32x32xf32>
    %25 = vector.shape_cast %24 : vector<32x32xf32> to vector<1x32x32xf32>
    %26 = vector.shape_cast %25 : vector<1x32x32xf32> to vector<1x32x32xf32>
    %27 = vector.broadcast %26 : vector<1x32x32xf32> to vector<4x32x32xf32>
    %c0_9 = arith.constant 0 : index
    %c0_10 = arith.constant 0 : index
    %c0_11 = arith.constant 0 : index
    %28 = vector.load %arg3[%c0_9, %c0_10, %c0_11] : memref<4x32x32xf32, #tpu.memory_space<vmem>>, vector<4x32x32xf32>
    "tpu.trace_start"() <{level = 10 : i32, message = "hmc,hce->hme"}> : () -> ()
    %cst_12 = arith.constant dense<0.000000e+00> : vector<4x32x32xf32>
    %29 = tpu.matmul %27, %28, %cst_12 {dimension_numbers = #tpu.dot_dimension_numbers<[2], [1], [1], [2], [0, 0, 0, 1, 1, 2], [0], [0]>} : vector<4x32x32xf32>, vector<4x32x32xf32>, vector<4x32x32xf32> -> vector<4x32x32xf32>
    "tpu.trace_stop"() : () -> ()
    %c0_13 = arith.constant 0 : index
    %c0_14 = arith.constant 0 : index
    %c0_15 = arith.constant 0 : index
    %30 = vector.load %arg4[%c0_13, %c0_14, %c0_15] : memref<4x32x32xf32, #tpu.memory_space<vmem>>, vector<4x32x32xf32>
    "tpu.trace_start"() <{level = 10 : i32, message = "hmc,hce->hme"}> : () -> ()
    %cst_16 = arith.constant dense<0.000000e+00> : vector<4x32x32xf32>
    %31 = tpu.matmul %27, %30, %cst_16 {dimension_numbers = #tpu.dot_dimension_numbers<[2], [1], [1], [2], [0, 0, 0, 1, 1, 2], [0], [0]>} : vector<4x32x32xf32>, vector<4x32x32xf32>, vector<4x32x32xf32> -> vector<4x32x32xf32>
    "tpu.trace_stop"() : () -> ()
    %32 = vector.shape_cast %29 : vector<4x32x32xf32> to vector<8x16x32xf32>
    %33 = vector.shape_cast %31 : vector<4x32x32xf32> to vector<8x16x32xf32>
    %34 = vector.shape_cast %27 : vector<4x32x32xf32> to vector<8x16x32xf32>
    "tpu.trace_start"() <{level = 10 : i32, message = "gic,gjc->gij"}> : () -> ()
    %cst_17 = arith.constant dense<0.000000e+00> : vector<8x16x16xf32>
    %35 = tpu.matmul %32, %34, %cst_17 {dimension_numbers = #tpu.dot_dimension_numbers<[2], [2], [1], [1], [0, 0, 0, 1, 1, 1], [0], [0]>} : vector<8x16x32xf32>, vector<8x16x32xf32>, vector<8x16x16xf32> -> vector<8x16x16xf32>
    "tpu.trace_stop"() : () -> ()
    %cst_18 = arith.constant dense<0xFF800000> : vector<8x16xf32>
    %36 = vector.multi_reduction <maximumf>, %35, %cst_18 [2] : vector<8x16x16xf32> to vector<8x16xf32>
    %37 = vector.shape_cast %36 : vector<8x16xf32> to vector<8x16x1xf32>
    %38 = vector.broadcast %37 : vector<8x16x1xf32> to vector<8x16x16xf32>
    %39 = arith.subf %35, %38 : vector<8x16x16xf32>
    %40 = math.exp %39 : vector<8x16x16xf32>
    %cst_19 = arith.constant dense<0.000000e+00> : vector<8x16xf32>
    %41 = vector.multi_reduction <add>, %40, %cst_19 [2] : vector<8x16x16xf32> to vector<8x16xf32>
    %42 = vector.shape_cast %41 : vector<8x16xf32> to vector<8x16x1xf32>
    %43 = tpu.reciprocal %42 {approx = true} : vector<8x16x1xf32> -> vector<8x16x1xf32>
    %44 = vector.broadcast %43 : vector<8x16x1xf32> to vector<8x16x16xf32>
    %45 = arith.mulf %40, %44 : vector<8x16x16xf32>
    "tpu.trace_start"() <{level = 10 : i32, message = "gik,gkc->gic"}> : () -> ()
    %cst_20 = arith.constant dense<0.000000e+00> : vector<8x16x32xf32>
    %46 = tpu.matmul %45, %33, %cst_20 {dimension_numbers = #tpu.dot_dimension_numbers<[2], [1], [1], [2], [0, 0, 0, 1, 1, 2], [0], [0]>} : vector<8x16x16xf32>, vector<8x16x32xf32>, vector<8x16x32xf32> -> vector<8x16x32xf32>
    "tpu.trace_stop"() : () -> ()
    %47 = vector.shape_cast %46 : vector<8x16x32xf32> to vector<4x32x32xf32>
    %cst_21 = arith.constant dense<0.000000e+00> : vector<32x32xf32>
    %48 = vector.multi_reduction <add>, %47, %cst_21 [0] : vector<4x32x32xf32> to vector<32x32xf32>
    %c0_22 = arith.constant 0 : index
    %c0_23 = arith.constant 0 : index
    %49 = vector.load %arg5[%c0_22, %c0_23] : memref<1x32xf32, #tpu.memory_space<vmem>>, vector<1x32xf32>
    %50 = vector.broadcast %49 : vector<1x32xf32> to vector<32x32xf32>
    %51 = arith.addf %48, %50 : vector<32x32xf32>
    %52 = arith.addf %0, %51 : vector<32x32xf32>
    %c0_24 = arith.constant 0 : index
    %c0_25 = arith.constant 0 : index
    %53 = vector.load %arg6[%c0_24, %c0_25] : memref<1x32xf32, #tpu.memory_space<vmem>>, vector<1x32xf32>
    %c0_26 = arith.constant 0 : index
    %c0_27 = arith.constant 0 : index
    %54 = vector.load %arg7[%c0_26, %c0_27] : memref<1x32xf32, #tpu.memory_space<vmem>>, vector<1x32xf32>
    %cst_28 = arith.constant dense<0.000000e+00> : vector<32xf32>
    %55 = vector.multi_reduction <add>, %52, %cst_28 [1] : vector<32x32xf32> to vector<32xf32>
    %56 = vector.shape_cast %55 : vector<32xf32> to vector<32x1xf32>
    %cst_29 = arith.constant 3.200000e+01 : f32
    %57 = vector.broadcast %cst_29 : f32 to vector<32x1xf32>
    %58 = arith.divf %56, %57 : vector<32x1xf32>
    %59 = vector.broadcast %58 : vector<32x1xf32> to vector<32x32xf32>
    %60 = arith.subf %52, %59 : vector<32x32xf32>
    %61 = arith.mulf %60, %60 : vector<32x32xf32>
    %cst_30 = arith.constant dense<0.000000e+00> : vector<32xf32>
    %62 = vector.multi_reduction <add>, %61, %cst_30 [1] : vector<32x32xf32> to vector<32xf32>
    %63 = vector.shape_cast %62 : vector<32xf32> to vector<32x1xf32>
    %cst_31 = arith.constant 3.200000e+01 : f32
    %64 = vector.broadcast %cst_31 : f32 to vector<32x1xf32>
    %65 = arith.divf %63, %64 : vector<32x1xf32>
    %66 = vector.broadcast %58 : vector<32x1xf32> to vector<32x32xf32>
    %67 = arith.subf %52, %66 : vector<32x32xf32>
    %cst_32 = arith.constant 9.99999974E-6 : f32
    %68 = vector.broadcast %cst_32 : f32 to vector<32x1xf32>
    %69 = arith.addf %65, %68 : vector<32x1xf32>
    %70 = math.rsqrt %69 : vector<32x1xf32>
    %71 = vector.broadcast %70 : vector<32x1xf32> to vector<32x32xf32>
    %72 = arith.mulf %67, %71 : vector<32x32xf32>
    %73 = vector.broadcast %53 : vector<1x32xf32> to vector<32x32xf32>
    %74 = arith.mulf %72, %73 : vector<32x32xf32>
    %75 = vector.broadcast %54 : vector<1x32xf32> to vector<32x32xf32>
    %76 = arith.addf %74, %75 : vector<32x32xf32>
    %c0_33 = arith.constant 0 : index
    %c0_34 = arith.constant 0 : index
    %77 = vector.load %arg8[%c0_33, %c0_34] : memref<32x128xf32, #tpu.memory_space<vmem>>, vector<32x128xf32>
    %cst_35 = arith.constant dense<0.000000e+00> : vector<32x128xf32>
    %78 = tpu.matmul %76, %77, %cst_35 {dimension_numbers = #tpu.dot_dimension_numbers<[1], [0], [0], [1], [0, 0, 1, 1], [], []>} : vector<32x32xf32>, vector<32x128xf32>, vector<32x128xf32> -> vector<32x128xf32>
    %c0_36 = arith.constant 0 : index
    %c0_37 = arith.constant 0 : index
    %79 = vector.load %arg9[%c0_36, %c0_37] : memref<1x128xf32, #tpu.memory_space<vmem>>, vector<1x128xf32>
    %80 = vector.broadcast %79 : vector<1x128xf32> to vector<32x128xf32>
    %81 = arith.addf %78, %80 : vector<32x128xf32>
    %cst_38 = arith.constant 5.000000e-01 : f32
    %82 = vector.broadcast %cst_38 : f32 to vector<32x128xf32>
    %83 = arith.mulf %82, %81 : vector<32x128xf32>
    %cst_39 = arith.constant 0.707106769 : f32
    %84 = vector.broadcast %cst_39 : f32 to vector<32x128xf32>
    %85 = arith.mulf %81, %84 : vector<32x128xf32>
    %86 = math.erf %85 : vector<32x128xf32>
    %cst_40 = arith.constant 1.000000e+00 : f32
    %87 = vector.broadcast %cst_40 : f32 to vector<32x128xf32>
    %88 = arith.addf %87, %86 : vector<32x128xf32>
    %89 = arith.mulf %83, %88 : vector<32x128xf32>
    %c0_41 = arith.constant 0 : index
    %c0_42 = arith.constant 0 : index
    %90 = vector.load %arg10[%c0_41, %c0_42] : memref<128x32xf32, #tpu.memory_space<vmem>>, vector<128x32xf32>
    %cst_43 = arith.constant dense<0.000000e+00> : vector<32x32xf32>
    %91 = tpu.matmul %89, %90, %cst_43 {dimension_numbers = #tpu.dot_dimension_numbers<[1], [0], [0], [1], [0, 0, 1, 1], [], []>} : vector<32x128xf32>, vector<128x32xf32>, vector<32x32xf32> -> vector<32x32xf32>
    %c0_44 = arith.constant 0 : index
    %c0_45 = arith.constant 0 : index
    %92 = vector.load %arg11[%c0_44, %c0_45] : memref<1x32xf32, #tpu.memory_space<vmem>>, vector<1x32xf32>
    %93 = vector.broadcast %92 : vector<1x32xf32> to vector<32x32xf32>
    %94 = arith.addf %91, %93 : vector<32x32xf32>
    %95 = arith.addf %52, %94 : vector<32x32xf32>
    %c0_46 = arith.constant 0 : index
    %c0_47 = arith.constant 0 : index
    %96 = vector.load %arg12[%c0_46, %c0_47] : memref<32x32xf32, #tpu.memory_space<vmem>>, vector<32x32xf32>
    tpu.vector_store %arg12[%c0_46, %c0_47], %95 {strides = array<i32>} : memref<32x32xf32, #tpu.memory_space<vmem>>, vector<32x32xf32>,
    return
  }
}

</mosaic_0001>

<llo_original>
// kernel: transformer_block.1
$region0: #{transformer_block.1}
  #allocation0 [shape = 'u32[]', space=smem, size = 0x4, offset = 0x4, fixed_abs, tag = 'smem constant byte address 0x4 - core index']
  #allocation1 [shape = 'u32[72,128]{1,0:T(1,128)}', space=vmem, size = 0x9000, scoped, tag = 'internal scratch']
  %s0 = inlined_call_operand.vmem [shape: f32[32,32], index: 0, kind: input, shape index: {}]
  %s1 = inlined_call_operand.vmem [shape: f32[1,32], index: 1, kind: input, shape index: {}]
  %s2 = inlined_call_operand.vmem [shape: f32[1,32], index: 2, kind: input, shape index: {}]
  %s3 = inlined_call_operand.vmem [shape: f32[4,32,32], index: 3, kind: input, shape index: {}]
  %s4 = inlined_call_operand.vmem [shape: f32[4,32,32], index: 4, kind: input, shape index: {}]
  %s5 = inlined_call_operand.vmem [shape: f32[1,32], index: 5, kind: input, shape index: {}]
  %s6 = inlined_call_operand.vmem [shape: f32[1,32], index: 6, kind: input, shape index: {}]
  %s7 = inlined_call_operand.vmem [shape: f32[1,32], index: 7, kind: input, shape index: {}]
  %s8 = inlined_call_operand.vmem [shape: f32[32,128], index: 8, kind: input, shape index: {}]
  %s9 = inlined_call_operand.vmem [shape: f32[1,128], index: 9, kind: input, shape index: {}]
  %s10 = inlined_call_operand.vmem [shape: f32[128,32], index: 10, kind: input, shape index: {}]
  %s11 = inlined_call_operand.vmem [shape: f32[1,32], index: 11, kind: input, shape index: {}]
  %s12 = inlined_call_operand.hbm [shape: f32[32,32], index: 12, kind: output, shape index: {}]
  %s13 = sld [smem:[#allocation0]]
  $region58: #{transformer_block.1} parent=0
    _
  %s15 = ssub.s32 1, %s13
  %s16 = scalar_select 0, %s15, %s13
  $region1: #{transformer_block.1} parent=0
    #allocation2 [shape = 'u8[16384]{0}', space=vmem, size = 0x4000, scoped, tag = 'output window, operand 0, single buffered']
    #allocation3 [shape = 's32[1]{0}', space=sflag, size = 0x4, scoped, tag = 'scoped memory for transformer_block.1']
    %17 = vsyncpa [#allocation3], 0
    // Predicated region
    $region2: #{transformer_block.1} parent=1 // pred_check
      _
    $region3: #{transformer_block.1} parent=1 // pred_check_branch
      %19 = sbr.rel (0) target = $region5
    $region4: #{transformer_block.1} parent=1 // pred_region
      _
    $region5: #{transformer_block.1} parent=1 // pred_fallthru
      _
    // Predicated region
    $region6: #{transformer_block.1} parent=1 // pred_check
      _
    $region7: #{transformer_block.1} parent=1 // pred_check_branch
      %21 = sbr.rel (0) target = $region9
    $region8: #{transformer_block.1} parent=1 // pred_region
      _
    $region9: #{transformer_block.1} parent=1 // pred_fallthru
      _
    // Predicated region
    $region10: #{transformer_block.1} parent=1 // pred_check
      _
    $region11: #{transformer_block.1} parent=1 // pred_check_branch
      %23 = sbr.rel (0) target = $region13
    $region12: #{transformer_block.1} parent=1 // pred_region
      _
    $region13: #{transformer_block.1} parent=1 // pred_fallthru
      _
    // Predicated region
    $region14: #{transformer_block.1} parent=1 // pred_check
      _
    $region15: #{transformer_block.1} parent=1 // pred_check_branch
      %25 = sbr.rel (0) target = $region17
    $region16: #{transformer_block.1} parent=1 // pred_region
      _
    $region17: #{transformer_block.1} parent=1 // pred_fallthru
      _
    // Predicated region
    $region18: #{transformer_block.1} parent=1 // pred_check
      _
    $region19: #{transformer_block.1} parent=1 // pred_check_branch
      %27 = sbr.rel (0) target = $region21
    $region20: #{transformer_block.1} parent=1 // pred_region
      _
    $region21: #{transformer_block.1} parent=1 // pred_fallthru
      _
    // Predicated region
    $region22: #{transformer_block.1} parent=1 // pred_check
      _
    $region23: #{transformer_block.1} parent=1 // pred_check_branch
      %29 = sbr.rel (0) target = $region25
    $region24: #{transformer_block.1} parent=1 // pred_region
      _
    $region25: #{transformer_block.1} parent=1 // pred_fallthru
      _
    // Predicated region
    $region26: #{transformer_block.1} parent=1 // pred_check
      _
    $region27: #{transformer_block.1} parent=1 // pred_check_branch
      %31 = sbr.rel (0) target = $region29
    $region28: #{transformer_block.1} parent=1 // pred_region
      _
    $region29: #{transformer_block.1} parent=1 // pred_fallthru
      _
    // Predicated region
    $region30: #{transformer_block.1} parent=1 // pred_check
      _
    $region31: #{transformer_block.1} parent=1 // pred_check_branch
      %33 = sbr.rel (0) target = $region33
    $region32: #{transformer_block.1} parent=1 // pred_region
      _
    $region33: #{transformer_block.1} parent=1 // pred_fallthru
      _
    // Predicated region
    $region34: #{transformer_block.1} parent=1 // pred_check
      _
    $region35: #{transformer_block.1} parent=1 // pred_check_branch
      %35 = sbr.rel (0) target = $region37
    $region36: #{transformer_block.1} parent=1 // pred_region
      _
    $region37: #{transformer_block.1} parent=1 // pred_fallthru
      _
    // Predicated region
    $region38: #{transformer_block.1} parent=1 // pred_check
      _
    $region39: #{transformer_block.1} parent=1 // pred_check_branch
      %37 = sbr.rel (0) target = $region41
    $region40: #{transformer_block.1} parent=1 // pred_region
      _
    $region41: #{transformer_block.1} parent=1 // pred_fallthru
      _
    // Predicated region
    $region42: #{transformer_block.1} parent=1 // pred_check
      _
    $region43: #{transformer_block.1} parent=1 // pred_check_branch
      %39 = sbr.rel (0) target = $region45
    $region44: #{transformer_block.1} parent=1 // pred_region
      _
    $region45: #{transformer_block.1} parent=1 // pred_fallthru
      _
    // Predicated region
    $region46: #{transformer_block.1} parent=1 // pred_check
      _
    $region47: #{transformer_block.1} parent=1 // pred_check_branch
      %41 = sbr.rel (0) target = $region49
    $region48: #{transformer_block.1} parent=1 // pred_region
      _
    $region49: #{transformer_block.1} parent=1 // pred_fallthru
      _
    %v42 = vld [vmem:[%s0] sm:$0xff]
    %v43 = vld [vmem:[%s0 + $0x8] sm:$0xff]
    %v44 = vld [vmem:[%s0 + $0x10] sm:$0xff]
    %v45 = vld [vmem:[%s0 + $0x18] sm:$0xff]
    %v46 = vld [vmem:[%s1] sm:$0x1]
    %v47 = vld [vmem:[%s2] sm:$0x1]
    %vm48 = vcmask 261120
    %v49 = vsel %vm48, %v42, 0.0
    %50 = vadd.xlane.f32.xlu0 %v49
    %v51 = vpop.xlane.xlu0 %50
    %v52 = vsel %vm48, %v43, 0.0
    %53 = vadd.xlane.f32.xlu0 %v52
    %v54 = vpop.xlane.xlu0 %53
    %v55 = vsel %vm48, %v44, 0.0
    %56 = vadd.xlane.f32.xlu0 %v55
    %v57 = vpop.xlane.xlu0 %56
    %v58 = vsel %vm48, %v45, 0.0
    %59 = vadd.xlane.f32.xlu0 %v58
    %v60 = vpop.xlane.xlu0 %59
    %v61 = vrcp.pop 32.0
    %v62 = vmul.f32 32.0, %v61
    %v63 = vsub.f32 1.0, %v62
    %v64 = vmul.f32 %v61, %v63
    %v65 = vadd.f32 %v61, %v64
    %vm66 = vweird.f32 %v61
    %v67 = vsel %vm66, %v61, %v65
    %v68 = vmul.f32 %v51, %v67
    %v69 = vmul.f32 %v54, %v67
    %v70 = vmul.f32 %v57, %v67
    %v71 = vmul.f32 %v60, %v67
    %v72 = vsub.f32 %v42, %v68
    %v73 = vsub.f32 %v43, %v69
    %v74 = vsub.f32 %v44, %v70
    %v75 = vsub.f32 %v45, %v71
    %v76 = vmul.f32 %v72, %v72
    %v77 = vmul.f32 %v73, %v73
    %v78 = vmul.f32 %v74, %v74
    %v79 = vmul.f32 %v75, %v75
    %v80 = vsel %vm48, %v76, 0.0
    %81 = vadd.xlane.f32.xlu0 %v80
    %v82 = vpop.xlane.xlu0 %81
    %v83 = vsel %vm48, %v77, 0.0
    %84 = vadd.xlane.f32.xlu0 %v83
    %v85 = vpop.xlane.xlu0 %84
    %v86 = vsel %vm48, %v78, 0.0
    %87 = vadd.xlane.f32.xlu0 %v86
    %v88 = vpop.xlane.xlu0 %87
    %v89 = vsel %vm48, %v79, 0.0
    %90 = vadd.xlane.f32.xlu0 %v89
    %v91 = vpop.xlane.xlu0 %90
    %v92 = vmul.f32 %v82, %v67
    %v93 = vmul.f32 %v85, %v67
    %v94 = vmul.f32 %v88, %v67
    %v95 = vmul.f32 %v91, %v67
    %v96 = vadd.f32 %v92, 1e-05
    %v97 = vadd.f32 %v93, 1e-05
    %v98 = vadd.f32 %v94, 1e-05
    %v99 = vadd.f32 %v95, 1e-05
    %v100 = vrsqrt.pop %v96
    %v101 = vmul.f32 %v100, %v96
    %v102 = vmul.f32 %v101, %v100
    %v103 = vmul.f32 0.5, %v102
    %v104 = vsub.f32 1.5, %v103
    %v105 = vmul.f32 %v100, %v104
    %vm106 = vweird.f32 %v96
    %vm107 = vweird.f32 %v100
    %vm108 = vmor %vm106, %vm107
    %v109 = vsel %vm108, %v100, %v105
    %v110 = vrsqrt.pop %v97
    %v111 = vmul.f32 %v110, %v97
    %v112 = vmul.f32 %v111, %v110
    %v113 = vmul.f32 0.5, %v112
    %v114 = vsub.f32 1.5, %v113
    %v115 = vmul.f32 %v110, %v114
    %vm116 = vweird.f32 %v97
    %vm117 = vweird.f32 %v110
    %vm118 = vmor %vm116, %vm117
    %v119 = vsel %vm118, %v110, %v115
    %v120 = vrsqrt.pop %v98
    %v121 = vmul.f32 %v120, %v98
    %v122 = vmul.f32 %v121, %v120
    %v123 = vmul.f32 0.5, %v122
    %v124 = vsub.f32 1.5, %v123
    %v125 = vmul.f32 %v120, %v124
    %vm126 = vweird.f32 %v98
    %vm127 = vweird.f32 %v120
    %vm128 = vmor %vm126, %vm127
    %v129 = vsel %vm128, %v120, %v125
    %v130 = vrsqrt.pop %v99
    %v131 = vmul.f32 %v130, %v99
    %v132 = vmul.f32 %v131, %v130
    %v133 = vmul.f32 0.5, %v132
    %v134 = vsub.f32 1.5, %v133
    %v135 = vmul.f32 %v130, %v134
    %vm136 = vweird.f32 %v99
    %vm137 = vweird.f32 %v130
    %vm138 = vmor %vm136, %vm137
    %v139 = vsel %vm138, %v130, %v135
    %v140 = vmul.f32 %v72, %v109
    %v141 = vmul.f32 %v73, %v119
    %v142 = vmul.f32 %v74, %v129
    %v143 = vmul.f32 %v75, %v139
    %v145 = vperm.slane %v46, 0
    %v147 = vmul.f32 %v140, %v145
    %v148 = vmul.f32 %v141, %v145
    %v149 = vmul.f32 %v142, %v145
    %v150 = vmul.f32 %v143, %v145
    %v152 = vperm.slane %v47, 0
    %v154 = vadd.f32 %v147, %v152
    %v155 = vadd.f32 %v148, %v152
    %v156 = vadd.f32 %v149, %v152
    %v157 = vadd.f32 %v150, %v152
    %v158 = vld [vmem:[%s3] sm:$0xff]
    %v159 = vld [vmem:[%s3 + $0x8] sm:$0xff]
    %v160 = vld [vmem:[%s3 + $0x10] sm:$0xff]
    %v161 = vld [vmem:[%s3 + $0x18] sm:$0xff]
    %v162 = vld [vmem:[%s3 + $0x20] sm:$0xff]
    %v163 = vld [vmem:[%s3 + $0x28] sm:$0xff]
    %v164 = vld [vmem:[%s3 + $0x30] sm:$0xff]
    %v165 = vld [vmem:[%s3 + $0x38] sm:$0xff]
    %v166 = vld [vmem:[%s3 + $0x40] sm:$0xff]
    %v167 = vld [vmem:[%s3 + $0x48] sm:$0xff]
    %v168 = vld [vmem:[%s3 + $0x50] sm:$0xff]
    %v169 = vld [vmem:[%s3 + $0x58] sm:$0xff]
    %v170 = vld [vmem:[%s3 + $0x60] sm:$0xff]
    %v171 = vld [vmem:[%s3 + $0x68] sm:$0xff]
    %v172 = vld [vmem:[%s3 + $0x70] sm:$0xff]
    %v173 = vld [vmem:[%s3 + $0x78] sm:$0xff]
    %v175 = vsel %vm48, %v154, 0
    %v178 = vsel %vm48, %v155, 0
    %v181 = vsel %vm48, %v156, 0
    %v184 = vsel %vm48, %v157, 0
    %186 = vmatpush.msra.mxu0 0.0
    %187 = vmatpush.msra.mxu0 0.0
    %188 = vmatpush.msra.mxu0 0.0
    %189 = vmatpush.msra.mxu0 0.0
    %190 = vmatpush.msra.mxu0 0.0
    %191 = vmatpush.msra.mxu0 0.0
    %192 = vmatpush.msra.mxu0 0.0
    %193 = vmatpush.msra.mxu0 0.0
    %194 = vmatpush.msra.mxu0 0.0
    %195 = vmatpush.msra.mxu0 0.0
    %196 = vmatpush.msra.mxu0 0.0
    %197 = vmatpush.msra.mxu0 0.0
    %198 = vmatpush.msra.mxu0 %v161
    %199 = vmatpush.msra.mxu0 %v160
    %200 = vmatpush.msra.mxu0 %v159
    %201 = vmatpush.msra.mxu0 %v158
    %202 = vmatmul.f32.gmra.mxu0 %v175
    %v203 = vpop.f32.mrf.mxu0
    %v204 = vadd.f32 0.0, %v203
    %205 = vmatmul.f32.gmra.mxu0 %v178
    %v206 = vpop.f32.mrf.mxu0
    %v207 = vadd.f32 0.0, %v206
    %208 = vmatmul.f32.gmra.mxu0 %v181
    %v209 = vpop.f32.mrf.mxu0
    %v210 = vadd.f32 0.0, %v209
    %211 = vmatmul.f32.gmra.mxu0 %v184
    %v212 = vpop.f32.mrf.mxu0
    %v213 = vadd.f32 0.0, %v212
    %214 = vdwg.mxu0
    %215 = vmatpush.msra.mxu0 0.0
    %216 = vmatpush.msra.mxu0 0.0
    %217 = vmatpush.msra.mxu0 0.0
    %218 = vmatpush.msra.mxu0 0.0
    %219 = vmatpush.msra.mxu0 0.0
    %220 = vmatpush.msra.mxu0 0.0
    %221 = vmatpush.msra.mxu0 0.0
    %222 = vmatpush.msra.mxu0 0.0
    %223 = vmatpush.msra.mxu0 0.0
    %224 = vmatpush.msra.mxu0 0.0
    %225 = vmatpush.msra.mxu0 0.0
    %226 = vmatpush.msra.mxu0 0.0
    %227 = vmatpush.msra.mxu0 %v165
    %228 = vmatpush.msra.mxu0 %v164
    %229 = vmatpush.msra.mxu0 %v163
    %230 = vmatpush.msra.mxu0 %v162
    %231 = vmatmul.f32.gmra.mxu0 %v175
    %v232 = vpop.f32.mrf.mxu0
    %v233 = vadd.f32 0.0, %v232
    %234 = vmatmul.f32.gmra.mxu0 %v178
    %v235 = vpop.f32.mrf.mxu0
    %v236 = vadd.f32 0.0, %v235
    %237 = vmatmul.f32.gmra.mxu0 %v181
    %v238 = vpop.f32.mrf.mxu0
    %v239 = vadd.f32 0.0, %v238
    %240 = vmatmul.f32.gmra.mxu0 %v184
    %v241 = vpop.f32.mrf.mxu0
    %v242 = vadd.f32 0.0, %v241
    %243 = vdwg.mxu0
    %244 = vmatpush.msra.mxu0 0.0
    %245 = vmatpush.msra.mxu0 0.0
    %246 = vmatpush.msra.mxu0 0.0
    %247 = vmatpush.msra.mxu0 0.0
    %248 = vmatpush.msra.mxu0 0.0
    %249 = vmatpush.msra.mxu0 0.0
    %250 = vmatpush.msra.mxu0 0.0
    %251 = vmatpush.msra.mxu0 0.0
    %252 = vmatpush.msra.mxu0 0.0
    %253 = vmatpush.msra.mxu0 0.0
    %254 = vmatpush.msra.mxu0 0.0
    %255 = vmatpush.msra.mxu0 0.0
    %256 = vmatpush.msra.mxu0 %v169
    %257 = vmatpush.msra.mxu0 %v168
    %258 = vmatpush.msra.mxu0 %v167
    %259 = vmatpush.msra.mxu0 %v166
    %260 = vmatmul.f32.gmra.mxu0 %v175
    %v261 = vpop.f32.mrf.mxu0
    %v262 = vadd.f32 0.0, %v261
    %263 = vmatmul.f32.gmra.mxu0 %v178
    %v264 = vpop.f32.mrf.mxu0
    %v265 = vadd.f32 0.0, %v264
    %266 = vmatmul.f32.gmra.mxu0 %v181
    %v267 = vpop.f32.mrf.mxu0
    %v268 = vadd.f32 0.0, %v267
    %269 = vmatmul.f32.gmra.mxu0 %v184
    %v270 = vpop.f32.mrf.mxu0
    %v271 = vadd.f32 0.0, %v270
    %272 = vdwg.mxu0
    %273 = vmatpush.msra.mxu0 0.0
    %274 = vmatpush.msra.mxu0 0.0
    %275 = vmatpush.msra.mxu0 0.0
    %276 = vmatpush.msra.mxu0 0.0
    %277 = vmatpush.msra.mxu0 0.0
    %278 = vmatpush.msra.mxu0 0.0
    %279 = vmatpush.msra.mxu0 0.0
    %280 = vmatpush.msra.mxu0 0.0
    %281 = vmatpush.msra.mxu0 0.0
    %282 = vmatpush.msra.mxu0 0.0
    %283 = vmatpush.msra.mxu0 0.0
    %284 = vmatpush.msra.mxu0 0.0
    %285 = vmatpush.msra.mxu0 %v173
    %286 = vmatpush.msra.mxu0 %v172
    %287 = vmatpush.msra.mxu0 %v171
    %288 = vmatpush.msra.mxu0 %v170
    %289 = vmatmul.f32.gmra.mxu0 %v175
    %v290 = vpop.f32.mrf.mxu0
    %v291 = vadd.f32 0.0, %v290
    %292 = vmatmul.f32.gmra.mxu0 %v178
    %v293 = vpop.f32.mrf.mxu0
    %v294 = vadd.f32 0.0, %v293
    %295 = vmatmul.f32.gmra.mxu0 %v181
    %v296 = vpop.f32.mrf.mxu0
    %v297 = vadd.f32 0.0, %v296
    %298 = vmatmul.f32.gmra.mxu0 %v184
    %v299 = vpop.f32.mrf.mxu0
    %v300 = vadd.f32 0.0, %v299
    %301 = vdwg.mxu0
    %v302 = vld [vmem:[%s4] sm:$0xff]
    %v303 = vld [vmem:[%s4 + $0x8] sm:$0xff]
    %v304 = vld [vmem:[%s4 + $0x10] sm:$0xff]
    %v305 = vld [vmem:[%s4 + $0x18] sm:$0xff]
    %v306 = vld [vmem:[%s4 + $0x20] sm:$0xff]
    %v307 = vld [vmem:[%s4 + $0x28] sm:$0xff]
    %v308 = vld [vmem:[%s4 + $0x30] sm:$0xff]
    %v309 = vld [vmem:[%s4 + $0x38] sm:$0xff]
    %v310 = vld [vmem:[%s4 + $0x40] sm:$0xff]
    %v311 = vld [vmem:[%s4 + $0x48] sm:$0xff]
    %v312 = vld [vmem:[%s4 + $0x50] sm:$0xff]
    %v313 = vld [vmem:[%s4 + $0x58] sm:$0xff]
    %v314 = vld [vmem:[%s4 + $0x60] sm:$0xff]
    %v315 = vld [vmem:[%s4 + $0x68] sm:$0xff]
    %v316 = vld [vmem:[%s4 + $0x70] sm:$0xff]
    %v317 = vld [vmem:[%s4 + $0x78] sm:$0xff]
    %318 = vmatpush.msra.mxu0 0.0
    %319 = vmatpush.msra.mxu0 0.0
    %320 = vmatpush.msra.mxu0 0.0
    %321 = vmatpush.msra.mxu0 0.0
    %322 = vmatpush.msra.mxu0 0.0
    %323 = vmatpush.msra.mxu0 0.0
    %324 = vmatpush.msra.mxu0 0.0
    %325 = vmatpush.msra.mxu0 0.0
    %326 = vmatpush.msra.mxu0 0.0
    %327 = vmatpush.msra.mxu0 0.0
    %328 = vmatpush.msra.mxu0 0.0
    %329 = vmatpush.msra.mxu0 0.0
    %330 = vmatpush.msra.mxu0 %v305
    %331 = vmatpush.msra.mxu0 %v304
    %332 = vmatpush.msra.mxu0 %v303
    %333 = vmatpush.msra.mxu0 %v302
    %334 = vmatmul.f32.gmra.mxu0 %v175
    %v335 = vpop.f32.mrf.mxu0
    %v336 = vadd.f32 0.0, %v335
    %337 = vmatmul.f32.gmra.mxu0 %v178
    %v338 = vpop.f32.mrf.mxu0
    %v339 = vadd.f32 0.0, %v338
    %340 = vmatmul.f32.gmra.mxu0 %v181
    %v341 = vpop.f32.mrf.mxu0
    %v342 = vadd.f32 0.0, %v341
    %343 = vmatmul.f32.gmra.mxu0 %v184
    %v344 = vpop.f32.mrf.mxu0
    %v345 = vadd.f32 0.0, %v344
    %346 = vdwg.mxu0
    %347 = vmatpush.msra.mxu0 0.0
    %348 = vmatpush.msra.mxu0 0.0
    %349 = vmatpush.msra.mxu0 0.0
    %350 = vmatpush.msra.mxu0 0.0
    %351 = vmatpush.msra.mxu0 0.0
    %352 = vmatpush.msra.mxu0 0.0
    %353 = vmatpush.msra.mxu0 0.0
    %354 = vmatpush.msra.mxu0 0.0
    %355 = vmatpush.msra.mxu0 0.0
    %356 = vmatpush.msra.mxu0 0.0
    %357 = vmatpush.msra.mxu0 0.0
    %358 = vmatpush.msra.mxu0 0.0
    %359 = vmatpush.msra.mxu0 %v309
    %360 = vmatpush.msra.mxu0 %v308
    %361 = vmatpush.msra.mxu0 %v307
    %362 = vmatpush.msra.mxu0 %v306
    %363 = vmatmul.f32.gmra.mxu0 %v175
    %v364 = vpop.f32.mrf.mxu0
    %v365 = vadd.f32 0.0, %v364
    %366 = vmatmul.f32.gmra.mxu0 %v178
    %v367 = vpop.f32.mrf.mxu0
    %v368 = vadd.f32 0.0, %v367
    %369 = vmatmul.f32.gmra.mxu0 %v181
    %v370 = vpop.f32.mrf.mxu0
    %v371 = vadd.f32 0.0, %v370
    %372 = vmatmul.f32.gmra.mxu0 %v184
    %v373 = vpop.f32.mrf.mxu0
    %v374 = vadd.f32 0.0, %v373
    %375 = vdwg.mxu0
    %376 = vmatpush.msra.mxu0 0.0
    %377 = vmatpush.msra.mxu0 0.0
    %378 = vmatpush.msra.mxu0 0.0
    %379 = vmatpush.msra.mxu0 0.0
    %380 = vmatpush.msra.mxu0 0.0
    %381 = vmatpush.msra.mxu0 0.0
    %382 = vmatpush.msra.mxu0 0.0
    %383 = vmatpush.msra.mxu0 0.0
    %384 = vmatpush.msra.mxu0 0.0
    %385 = vmatpush.msra.mxu0 0.0
    %386 = vmatpush.msra.mxu0 0.0
    %387 = vmatpush.msra.mxu0 0.0
    %388 = vmatpush.msra.mxu0 %v313
    %389 = vmatpush.msra.mxu0 %v312
    %390 = vmatpush.msra.mxu0 %v311
    %391 = vmatpush.msra.mxu0 %v310
    %392 = vmatmul.f32.gmra.mxu0 %v175
    %v393 = vpop.f32.mrf.mxu0
    %v394 = vadd.f32 0.0, %v393
    %395 = vmatmul.f32.gmra.mxu0 %v178
    %v396 = vpop.f32.mrf.mxu0
    %v397 = vadd.f32 0.0, %v396
    %398 = vmatmul.f32.gmra.mxu0 %v181
    %v399 = vpop.f32.mrf.mxu0
    %v400 = vadd.f32 0.0, %v399
    %401 = vmatmul.f32.gmra.mxu0 %v184
    %v402 = vpop.f32.mrf.mxu0
    %v403 = vadd.f32 0.0, %v402
    %404 = vdwg.mxu0
    %405 = vmatpush.msra.mxu0 0.0
    %406 = vmatpush.msra.mxu0 0.0
    %407 = vmatpush.msra.mxu0 0.0
    %408 = vmatpush.msra.mxu0 0.0
    %409 = vmatpush.msra.mxu0 0.0
    %410 = vmatpush.msra.mxu0 0.0
    %411 = vmatpush.msra.mxu0 0.0
    %412 = vmatpush.msra.mxu0 0.0
    %413 = vmatpush.msra.mxu0 0.0
    %414 = vmatpush.msra.mxu0 0.0
    %415 = vmatpush.msra.mxu0 0.0
    %416 = vmatpush.msra.mxu0 0.0
    %417 = vmatpush.msra.mxu0 %v317
    %418 = vmatpush.msra.mxu0 %v316
    %419 = vmatpush.msra.mxu0 %v315
    %420 = vmatpush.msra.mxu0 %v314
    %421 = vmatmul.f32.gmra.mxu0 %v175
    %v422 = vpop.f32.mrf.mxu0
    %v423 = vadd.f32 0.0, %v422
    %424 = vmatmul.f32.gmra.mxu0 %v178
    %v425 = vpop.f32.mrf.mxu0
    %v426 = vadd.f32 0.0, %v425
    %427 = vmatmul.f32.gmra.mxu0 %v181
    %v428 = vpop.f32.mrf.mxu0
    %v429 = vadd.f32 0.0, %v428
    %430 = vmatmul.f32.gmra.mxu0 %v184
    %v431 = vpop.f32.mrf.mxu0
    %v432 = vadd.f32 0.0, %v431
    %433 = vdwg.mxu0
    %v435 = vsel %vm48, %v204, 0
    %v438 = vsel %vm48, %v207, 0
    %440 = vmatpush.xpose.msra.mxu0 0.0
    %441 = vmatpush.xpose.msra.mxu0 0.0
    %442 = vmatpush.xpose.msra.mxu0 0.0
    %443 = vmatpush.xpose.msra.mxu0 0.0
    %444 = vmatpush.xpose.msra.mxu0 0.0
    %445 = vmatpush.xpose.msra.mxu0 0.0
    %446 = vmatpush.xpose.msra.mxu0 0.0
    %447 = vmatpush.xpose.msra.mxu0 0.0
    %448 = vmatpush.xpose.msra.mxu0 0.0
    %449 = vmatpush.xpose.msra.mxu0 0.0
    %450 = vmatpush.xpose.msra.mxu0 0.0
    %451 = vmatpush.xpose.msra.mxu0 0.0
    %452 = vmatpush.xpose.msra.mxu0 0.0
    %453 = vmatpush.xpose.msra.mxu0 0.0
    %454 = vmatpush.xpose.msra.mxu0 %v178
    %455 = vmatpush.xpose.msra.mxu0 %v175
    %456 = vmatmul.f32.gmra.mxu0 %v435
    %v457 = vpop.f32.mrf.mxu0
    %v458 = vadd.f32 0.0, %v457
    %459 = vmatmul.f32.gmra.mxu0 %v438
    %v460 = vpop.f32.mrf.mxu0
    %v461 = vadd.f32 0.0, %v460
    %462 = vdwg.mxu0
    %v464 = vsel %vm48, %v210, 0
    %v467 = vsel %vm48, %v213, 0
    %469 = vmatpush.xpose.msra.mxu0 0.0
    %470 = vmatpush.xpose.msra.mxu0 0.0
    %471 = vmatpush.xpose.msra.mxu0 0.0
    %472 = vmatpush.xpose.msra.mxu0 0.0
    %473 = vmatpush.xpose.msra.mxu0 0.0
    %474 = vmatpush.xpose.msra.mxu0 0.0
    %475 = vmatpush.xpose.msra.mxu0 0.0
    %476 = vmatpush.xpose.msra.mxu0 0.0
    %477 = vmatpush.xpose.msra.mxu0 0.0
    %478 = vmatpush.xpose.msra.mxu0 0.0
    %479 = vmatpush.xpose.msra.mxu0 0.0
    %480 = vmatpush.xpose.msra.mxu0 0.0
    %481 = vmatpush.xpose.msra.mxu0 0.0
    %482 = vmatpush.xpose.msra.mxu0 0.0
    %483 = vmatpush.xpose.msra.mxu0 %v184
    %484 = vmatpush.xpose.msra.mxu0 %v181
    %485 = vmatmul.f32.gmra.mxu0 %v464
    %v486 = vpop.f32.mrf.mxu0
    %v487 = vadd.f32 0.0, %v486
    %488 = vmatmul.f32.gmra.mxu0 %v467
    %v489 = vpop.f32.mrf.mxu0
    %v490 = vadd.f32 0.0, %v489
    %491 = vdwg.mxu0
    %v493 = vsel %vm48, %v233, 0
    %v496 = vsel %vm48, %v236, 0
    %498 = vmatpush.xpose.msra.mxu0 0.0
    %499 = vmatpush.xpose.msra.mxu0 0.0
    %500 = vmatpush.xpose.msra.mxu0 0.0
    %501 = vmatpush.xpose.msra.mxu0 0.0
    %502 = vmatpush.xpose.msra.mxu0 0.0
    %503 = vmatpush.xpose.msra.mxu0 0.0
    %504 = vmatpush.xpose.msra.mxu0 0.0
    %505 = vmatpush.xpose.msra.mxu0 0.0
    %506 = vmatpush.xpose.msra.mxu0 0.0
    %507 = vmatpush.xpose.msra.mxu0 0.0
    %508 = vmatpush.xpose.msra.mxu0 0.0
    %509 = vmatpush.xpose.msra.mxu0 0.0
    %510 = vmatpush.xpose.msra.mxu0 0.0
    %511 = vmatpush.xpose.msra.mxu0 0.0
    %512 = vmatpush.xpose.msra.mxu0 %v178
    %513 = vmatpush.xpose.msra.mxu0 %v175
    %514 = vmatmul.f32.gmra.mxu0 %v493
    %v515 = vpop.f32.mrf.mxu0
    %v516 = vadd.f32 0.0, %v515
    %517 = vmatmul.f32.gmra.mxu0 %v496
    %v518 = vpop.f32.mrf.mxu0
    %v519 = vadd.f32 0.0, %v518
    %520 = vdwg.mxu0
    %v522 = vsel %vm48, %v239, 0
    %v525 = vsel %vm48, %v242, 0
    %527 = vmatpush.xpose.msra.mxu0 0.0
    %528 = vmatpush.xpose.msra.mxu0 0.0
    %529 = vmatpush.xpose.msra.mxu0 0.0
    %530 = vmatpush.xpose.msra.mxu0 0.0
    %531 = vmatpush.xpose.msra.mxu0 0.0
    %532 = vmatpush.xpose.msra.mxu0 0.0
    %533 = vmatpush.xpose.msra.mxu0 0.0
    %534 = vmatpush.xpose.msra.mxu0 0.0
    %535 = vmatpush.xpose.msra.mxu0 0.0
    %536 = vmatpush.xpose.msra.mxu0 0.0
    %537 = vmatpush.xpose.msra.mxu0 0.0
    %538 = vmatpush.xpose.msra.mxu0 0.0
    %539 = vmatpush.xpose.msra.mxu0 0.0
    %540 = vmatpush.xpose.msra.mxu0 0.0
    %541 = vmatpush.xpose.msra.mxu0 %v184
    %542 = vmatpush.xpose.msra.mxu0 %v181
    %543 = vmatmul.f32.gmra.mxu0 %v522
    %v544 = vpop.f32.mrf.mxu0
    %v545 = vadd.f32 0.0, %v544
    %546 = vmatmul.f32.gmra.mxu0 %v525
    %v547 = vpop.f32.mrf.mxu0
    %v548 = vadd.f32 0.0, %v547
    %549 = vdwg.mxu0
    %v551 = vsel %vm48, %v262, 0
    %v554 = vsel %vm48, %v265, 0
    %556 = vmatpush.xpose.msra.mxu0 0.0
    %557 = vmatpush.xpose.msra.mxu0 0.0
    %558 = vmatpush.xpose.msra.mxu0 0.0
    %559 = vmatpush.xpose.msra.mxu0 0.0
    %560 = vmatpush.xpose.msra.mxu0 0.0
    %561 = vmatpush.xpose.msra.mxu0 0.0
    %562 = vmatpush.xpose.msra.mxu0 0.0
    %563 = vmatpush.xpose.msra.mxu0 0.0
    %564 = vmatpush.xpose.msra.mxu0 0.0
    %565 = vmatpush.xpose.msra.mxu0 0.0
    %566 = vmatpush.xpose.msra.mxu0 0.0
    %567 = vmatpush.xpose.msra.mxu0 0.0
    %568 = vmatpush.xpose.msra.mxu0 0.0
    %569 = vmatpush.xpose.msra.mxu0 0.0
    %570 = vmatpush.xpose.msra.mxu0 %v178
    %571 = vmatpush.xpose.msra.mxu0 %v175
    %572 = vmatmul.f32.gmra.mxu0 %v551
    %v573 = vpop.f32.mrf.mxu0
    %v574 = vadd.f32 0.0, %v573
    %575 = vmatmul.f32.gmra.mxu0 %v554
    %v576 = vpop.f32.mrf.mxu0
    %v577 = vadd.f32 0.0, %v576
    %578 = vdwg.mxu0
    %v580 = vsel %vm48, %v268, 0
    %v583 = vsel %vm48, %v271, 0
    %585 = vmatpush.xpose.msra.mxu0 0.0
    %586 = vmatpush.xpose.msra.mxu0 0.0
    %587 = vmatpush.xpose.msra.mxu0 0.0
    %588 = vmatpush.xpose.msra.mxu0 0.0
    %589 = vmatpush.xpose.msra.mxu0 0.0
    %590 = vmatpush.xpose.msra.mxu0 0.0
    %591 = vmatpush.xpose.msra.mxu0 0.0
    %592 = vmatpush.xpose.msra.mxu0 0.0
    %593 = vmatpush.xpose.msra.mxu0 0.0
    %594 = vmatpush.xpose.msra.mxu0 0.0
    %595 = vmatpush.xpose.msra.mxu0 0.0
    %596 = vmatpush.xpose.msra.mxu0 0.0
    %597 = vmatpush.xpose.msra.mxu0 0.0
    %598 = vmatpush.xpose.msra.mxu0 0.0
    %599 = vmatpush.xpose.msra.mxu0 %v184
    %600 = vmatpush.xpose.msra.mxu0 %v181
    %601 = vmatmul.f32.gmra.mxu0 %v580
    %v602 = vpop.f32.mrf.mxu0
    %v603 = vadd.f32 0.0, %v602
    %604 = vmatmul.f32.gmra.mxu0 %v583
    %v605 = vpop.f32.mrf.mxu0
    %v606 = vadd.f32 0.0, %v605
    %607 = vdwg.mxu0
    %v609 = vsel %vm48, %v291, 0
    %v612 = vsel %vm48, %v294, 0
    %614 = vmatpush.xpose.msra.mxu0 0.0
    %615 = vmatpush.xpose.msra.mxu0 0.0
    %616 = vmatpush.xpose.msra.mxu0 0.0
    %617 = vmatpush.xpose.msra.mxu0 0.0
    %618 = vmatpush.xpose.msra.mxu0 0.0
    %619 = vmatpush.xpose.msra.mxu0 0.0
    %620 = vmatpush.xpose.msra.mxu0 0.0
    %621 = vmatpush.xpose.msra.mxu0 0.0
    %622 = vmatpush.xpose.msra.mxu0 0.0
    %623 = vmatpush.xpose.msra.mxu0 0.0
    %624 = vmatpush.xpose.msra.mxu0 0.0
    %625 = vmatpush.xpose.msra.mxu0 0.0
    %626 = vmatpush.xpose.msra.mxu0 0.0
    %627 = vmatpush.xpose.msra.mxu0 0.0
    %628 = vmatpush.xpose.msra.mxu0 %v178
    %629 = vmatpush.xpose.msra.mxu0 %v175
    %630 = vmatmul.f32.gmra.mxu0 %v609
    %v631 = vpop.f32.mrf.mxu0
    %v632 = vadd.f32 0.0, %v631
    %633 = vmatmul.f32.gmra.mxu0 %v612
    %v634 = vpop.f32.mrf.mxu0
    %v635 = vadd.f32 0.0, %v634
    %636 = vdwg.mxu0
    %v638 = vsel %vm48, %v297, 0
    %v641 = vsel %vm48, %v300, 0
    %643 = vmatpush.xpose.msra.mxu0 0.0
    %644 = vmatpush.xpose.msra.mxu0 0.0
    %645 = vmatpush.xpose.msra.mxu0 0.0
    %646 = vmatpush.xpose.msra.mxu0 0.0
    %647 = vmatpush.xpose.msra.mxu0 0.0
    %648 = vmatpush.xpose.msra.mxu0 0.0
    %649 = vmatpush.xpose.msra.mxu0 0.0
    %650 = vmatpush.xpose.msra.mxu0 0.0
    %651 = vmatpush.xpose.msra.mxu0 0.0
    %652 = vmatpush.xpose.msra.mxu0 0.0
    %653 = vmatpush.xpose.msra.mxu0 0.0
    %654 = vmatpush.xpose.msra.mxu0 0.0
    %655 = vmatpush.xpose.msra.mxu0 0.0
    %656 = vmatpush.xpose.msra.mxu0 0.0
    %657 = vmatpush.xpose.msra.mxu0 %v184
    %658 = vmatpush.xpose.msra.mxu0 %v181
    %659 = vmatmul.f32.gmra.mxu0 %v638
    %v660 = vpop.f32.mrf.mxu0
    %v661 = vadd.f32 0.0, %v660
    %662 = vmatmul.f32.gmra.mxu0 %v641
    %v663 = vpop.f32.mrf.mxu0
    %v664 = vadd.f32 0.0, %v663
    %665 = vdwg.mxu0
    %vm666 = vcmask 130048
    %v667 = vsel %vm666, %v458, -inf
    %668 = vmax.xlane.f32.xlu0 %v667
    %v669 = vpop.xlane.xlu0 %668
    %v670 = vsel %vm666, %v461, -inf
    %671 = vmax.xlane.f32.xlu0 %v670
    %v672 = vpop.xlane.xlu0 %671
    %v673 = vsel %vm666, %v487, -inf
    %674 = vmax.xlane.f32.xlu0 %v673
    %v675 = vpop.xlane.xlu0 %674
    %v676 = vsel %vm666, %v490, -inf
    %677 = vmax.xlane.f32.xlu0 %v676
    %v678 = vpop.xlane.xlu0 %677
    %v679 = vsel %vm666, %v516, -inf
    %680 = vmax.xlane.f32.xlu0 %v679
    %v681 = vpop.xlane.xlu0 %680
    %v682 = vsel %vm666, %v519, -inf
    %683 = vmax.xlane.f32.xlu0 %v682
    %v684 = vpop.xlane.xlu0 %683
    %v685 = vsel %vm666, %v545, -inf
    %686 = vmax.xlane.f32.xlu0 %v685
    %v687 = vpop.xlane.xlu0 %686
    %v688 = vsel %vm666, %v548, -inf
    %689 = vmax.xlane.f32.xlu0 %v688
    %v690 = vpop.xlane.xlu0 %689
    %v691 = vsel %vm666, %v574, -inf
    %692 = vmax.xlane.f32.xlu0 %v691
    %v693 = vpop.xlane.xlu0 %692
    %v694 = vsel %vm666, %v577, -inf
    %695 = vmax.xlane.f32.xlu0 %v694
    %v696 = vpop.xlane.xlu0 %695
    %v697 = vsel %vm666, %v603, -inf
    %698 = vmax.xlane.f32.xlu0 %v697
    %v699 = vpop.xlane.xlu0 %698
    %v700 = vsel %vm666, %v606, -inf
    %701 = vmax.xlane.f32.xlu0 %v700
    %v702 = vpop.xlane.xlu0 %701
    %v703 = vsel %vm666, %v632, -inf
    %704 = vmax.xlane.f32.xlu0 %v703
    %v705 = vpop.xlane.xlu0 %704
    %v706 = vsel %vm666, %v635, -inf
    %707 = vmax.xlane.f32.xlu0 %v706
    %v708 = vpop.xlane.xlu0 %707
    %v709 = vsel %vm666, %v661, -inf
    %710 = vmax.xlane.f32.xlu0 %v709
    %v711 = vpop.xlane.xlu0 %710
    %v712 = vsel %vm666, %v664, -inf
    %713 = vmax.xlane.f32.xlu0 %v712
    %v714 = vpop.xlane.xlu0 %713
    %v715 = vsub.f32 %v458, %v669
    %v716 = vsub.f32 %v461, %v672
    %v717 = vsub.f32 %v487, %v675
    %v718 = vsub.f32 %v490, %v678
    %v719 = vsub.f32 %v516, %v681
    %v720 = vsub.f32 %v519, %v684
    %v721 = vsub.f32 %v545, %v687
    %v722 = vsub.f32 %v548, %v690
    %v723 = vsub.f32 %v574, %v693
    %v724 = vsub.f32 %v577, %v696
    %v725 = vsub.f32 %v603, %v699
    %v726 = vsub.f32 %v606, %v702
    %v727 = vsub.f32 %v632, %v705
    %v728 = vsub.f32 %v635, %v708
    %v729 = vsub.f32 %v661, %v711
    %v730 = vsub.f32 %v664, %v714
    %v731 = vmul.f32 %v715, 1.442695
    %v732 = vpow.pop %v731
    %v733 = vmul.f32 %v716, 1.442695
    %v734 = vpow.pop %v733
    %v735 = vmul.f32 %v717, 1.442695
    %v736 = vpow.pop %v735
    %v737 = vmul.f32 %v718, 1.442695
    %v738 = vpow.pop %v737
    %v739 = vmul.f32 %v719, 1.442695
    %v740 = vpow.pop %v739
    %v741 = vmul.f32 %v720, 1.442695
    %v742 = vpow.pop %v741
    %v743 = vmul.f32 %v721, 1.442695
    %v744 = vpow.pop %v743
    %v745 = vmul.f32 %v722, 1.442695
    %v746 = vpow.pop %v745
    %v747 = vmul.f32 %v723, 1.442695
    %v748 = vpow.pop %v747
    %v749 = vmul.f32 %v724, 1.442695
    %v750 = vpow.pop %v749
    %v751 = vmul.f32 %v725, 1.442695
    %v752 = vpow.pop %v751
    %v753 = vmul.f32 %v726, 1.442695
    %v754 = vpow.pop %v753
    %v755 = vmul.f32 %v727, 1.442695
    %v756 = vpow.pop %v755
    %v757 = vmul.f32 %v728, 1.442695
    %v758 = vpow.pop %v757
    %v759 = vmul.f32 %v729, 1.442695
    %v760 = vpow.pop %v759
    %v761 = vmul.f32 %v730, 1.442695
    %v762 = vpow.pop %v761
    %v763 = vsel %vm666, %v732, 0.0
    %764 = vadd.xlane.f32.xlu0 %v763
    %v765 = vpop.xlane.xlu0 %764
    %v766 = vsel %vm666, %v734, 0.0
    %767 = vadd.xlane.f32.xlu0 %v766
    %v768 = vpop.xlane.xlu0 %767
    %v769 = vsel %vm666, %v736, 0.0
    %770 = vadd.xlane.f32.xlu0 %v769
    %v771 = vpop.xlane.xlu0 %770
    %v772 = vsel %vm666, %v738, 0.0
    %773 = vadd.xlane.f32.xlu0 %v772
    %v774 = vpop.xlane.xlu0 %773
    %v775 = vsel %vm666, %v740, 0.0
    %776 = vadd.xlane.f32.xlu0 %v775
    %v777 = vpop.xlane.xlu0 %776
    %v778 = vsel %vm666, %v742, 0.0
    %779 = vadd.xlane.f32.xlu0 %v778
    %v780 = vpop.xlane.xlu0 %779
    %v781 = vsel %vm666, %v744, 0.0
    %782 = vadd.xlane.f32.xlu0 %v781
    %v783 = vpop.xlane.xlu0 %782
    %v784 = vsel %vm666, %v746, 0.0
    %785 = vadd.xlane.f32.xlu0 %v784
    %v786 = vpop.xlane.xlu0 %785
    %v787 = vsel %vm666, %v748, 0.0
    %788 = vadd.xlane.f32.xlu0 %v787
    %v789 = vpop.xlane.xlu0 %788
    %v790 = vsel %vm666, %v750, 0.0
    %791 = vadd.xlane.f32.xlu0 %v790
    %v792 = vpop.xlane.xlu0 %791
    %v793 = vsel %vm666, %v752, 0.0
    %794 = vadd.xlane.f32.xlu0 %v793
    %v795 = vpop.xlane.xlu0 %794
    %v796 = vsel %vm666, %v754, 0.0
    %797 = vadd.xlane.f32.xlu0 %v796
    %v798 = vpop.xlane.xlu0 %797
    %v799 = vsel %vm666, %v756, 0.0
    %800 = vadd.xlane.f32.xlu0 %v799
    %v801 = vpop.xlane.xlu0 %800
    %v802 = vsel %vm666, %v758, 0.0
    %803 = vadd.xlane.f32.xlu0 %v802
    %v804 = vpop.xlane.xlu0 %803
    %v805 = vsel %vm666, %v760, 0.0
    %806 = vadd.xlane.f32.xlu0 %v805
    %v807 = vpop.xlane.xlu0 %806
    %v808 = vsel %vm666, %v762, 0.0
    %809 = vadd.xlane.f32.xlu0 %v808
    %v810 = vpop.xlane.xlu0 %809
    %v811 = vrcp.pop %v765
    %v812 = vrcp.pop %v768
    %v813 = vrcp.pop %v771
    %v814 = vrcp.pop %v774
    %v815 = vrcp.pop %v777
    %v816 = vrcp.pop %v780
    %v817 = vrcp.pop %v783
    %v818 = vrcp.pop %v786
    %v819 = vrcp.pop %v789
    %v820 = vrcp.pop %v792
    %v821 = vrcp.pop %v795
    %v822 = vrcp.pop %v798
    %v823 = vrcp.pop %v801
    %v824 = vrcp.pop %v804
    %v825 = vrcp.pop %v807
    %v826 = vrcp.pop %v810
    %v827 = vmul.f32 %v732, %v811
    %v828 = vmul.f32 %v734, %v812
    %v829 = vmul.f32 %v736, %v813
    %v830 = vmul.f32 %v738, %v814
    %v831 = vmul.f32 %v740, %v815
    %v832 = vmul.f32 %v742, %v816
    %v833 = vmul.f32 %v744, %v817
    %v834 = vmul.f32 %v746, %v818
    %v835 = vmul.f32 %v748, %v819
    %v836 = vmul.f32 %v750, %v820
    %v837 = vmul.f32 %v752, %v821
    %v838 = vmul.f32 %v754, %v822
    %v839 = vmul.f32 %v756, %v823
    %v840 = vmul.f32 %v758, %v824
    %v841 = vmul.f32 %v760, %v825
    %v842 = vmul.f32 %v762, %v826
    %v844 = vsel %vm666, %v827, 0
    %v847 = vsel %vm666, %v828, 0
    %849 = vmatpush.msra.mxu0 0.0
    %850 = vmatpush.msra.mxu0 0.0
    %851 = vmatpush.msra.mxu0 0.0
    %852 = vmatpush.msra.mxu0 0.0
    %853 = vmatpush.msra.mxu0 0.0
    %854 = vmatpush.msra.mxu0 0.0
    %855 = vmatpush.msra.mxu0 0.0
    %856 = vmatpush.msra.mxu0 0.0
    %857 = vmatpush.msra.mxu0 0.0
    %858 = vmatpush.msra.mxu0 0.0
    %859 = vmatpush.msra.mxu0 0.0
    %860 = vmatpush.msra.mxu0 0.0
    %861 = vmatpush.msra.mxu0 0.0
    %862 = vmatpush.msra.mxu0 0.0
    %863 = vmatpush.msra.mxu0 %v339
    %864 = vmatpush.msra.mxu0 %v336
    %865 = vmatmul.f32.gmra.mxu0 %v844
    %v866 = vpop.f32.mrf.mxu0
    %v867 = vadd.f32 0.0, %v866
    %868 = vmatmul.f32.gmra.mxu0 %v847
    %v869 = vpop.f32.mrf.mxu0
    %v870 = vadd.f32 0.0, %v869
    %871 = vdwg.mxu0
    %v873 = vsel %vm666, %v829, 0
    %v876 = vsel %vm666, %v830, 0
    %878 = vmatpush.msra.mxu0 0.0
    %879 = vmatpush.msra.mxu0 0.0
    %880 = vmatpush.msra.mxu0 0.0
    %881 = vmatpush.msra.mxu0 0.0
    %882 = vmatpush.msra.mxu0 0.0
    %883 = vmatpush.msra.mxu0 0.0
    %884 = vmatpush.msra.mxu0 0.0
    %885 = vmatpush.msra.mxu0 0.0
    %886 = vmatpush.msra.mxu0 0.0
    %887 = vmatpush.msra.mxu0 0.0
    %888 = vmatpush.msra.mxu0 0.0
    %889 = vmatpush.msra.mxu0 0.0
    %890 = vmatpush.msra.mxu0 0.0
    %891 = vmatpush.msra.mxu0 0.0
    %892 = vmatpush.msra.mxu0 %v345
    %893 = vmatpush.msra.mxu0 %v342
    %894 = vmatmul.f32.gmra.mxu0 %v873
    %v895 = vpop.f32.mrf.mxu0
    %v896 = vadd.f32 0.0, %v895
    %897 = vmatmul.f32.gmra.mxu0 %v876
    %v898 = vpop.f32.mrf.mxu0
    %v899 = vadd.f32 0.0, %v898
    %900 = vdwg.mxu0
    %v902 = vsel %vm666, %v831, 0
    %v905 = vsel %vm666, %v832, 0
    %907 = vmatpush.msra.mxu0 0.0
    %908 = vmatpush.msra.mxu0 0.0
    %909 = vmatpush.msra.mxu0 0.0
    %910 = vmatpush.msra.mxu0 0.0
    %911 = vmatpush.msra.mxu0 0.0
    %912 = vmatpush.msra.mxu0 0.0
    %913 = vmatpush.msra.mxu0 0.0
    %914 = vmatpush.msra.mxu0 0.0
    %915 = vmatpush.msra.mxu0 0.0
    %916 = vmatpush.msra.mxu0 0.0
    %917 = vmatpush.msra.mxu0 0.0
    %918 = vmatpush.msra.mxu0 0.0
    %919 = vmatpush.msra.mxu0 0.0
    %920 = vmatpush.msra.mxu0 0.0
    %921 = vmatpush.msra.mxu0 %v368
    %922 = vmatpush.msra.mxu0 %v365
    %923 = vmatmul.f32.gmra.mxu0 %v902
    %v924 = vpop.f32.mrf.mxu0
    %v925 = vadd.f32 0.0, %v924
    %926 = vmatmul.f32.gmra.mxu0 %v905
    %v927 = vpop.f32.mrf.mxu0
    %v928 = vadd.f32 0.0, %v927
    %929 = vdwg.mxu0
    %v931 = vsel %vm666, %v833, 0
    %v934 = vsel %vm666, %v834, 0
    %936 = vmatpush.msra.mxu0 0.0
    %937 = vmatpush.msra.mxu0 0.0
    %938 = vmatpush.msra.mxu0 0.0
    %939 = vmatpush.msra.mxu0 0.0
    %940 = vmatpush.msra.mxu0 0.0
    %941 = vmatpush.msra.mxu0 0.0
    %942 = vmatpush.msra.mxu0 0.0
    %943 = vmatpush.msra.mxu0 0.0
    %944 = vmatpush.msra.mxu0 0.0
    %945 = vmatpush.msra.mxu0 0.0
    %946 = vmatpush.msra.mxu0 0.0
    %947 = vmatpush.msra.mxu0 0.0
    %948 = vmatpush.msra.mxu0 0.0
    %949 = vmatpush.msra.mxu0 0.0
    %950 = vmatpush.msra.mxu0 %v374
    %951 = vmatpush.msra.mxu0 %v371
    %952 = vmatmul.f32.gmra.mxu0 %v931
    %v953 = vpop.f32.mrf.mxu0
    %v954 = vadd.f32 0.0, %v953
    %955 = vmatmul.f32.gmra.mxu0 %v934
    %v956 = vpop.f32.mrf.mxu0
    %v957 = vadd.f32 0.0, %v956
    %958 = vdwg.mxu0
    %v960 = vsel %vm666, %v835, 0
    %v963 = vsel %vm666, %v836, 0
    %965 = vmatpush.msra.mxu0 0.0
    %966 = vmatpush.msra.mxu0 0.0
    %967 = vmatpush.msra.mxu0 0.0
    %968 = vmatpush.msra.mxu0 0.0
    %969 = vmatpush.msra.mxu0 0.0
    %970 = vmatpush.msra.mxu0 0.0
    %971 = vmatpush.msra.mxu0 0.0
    %972 = vmatpush.msra.mxu0 0.0
    %973 = vmatpush.msra.mxu0 0.0
    %974 = vmatpush.msra.mxu0 0.0
    %975 = vmatpush.msra.mxu0 0.0
    %976 = vmatpush.msra.mxu0 0.0
    %977 = vmatpush.msra.mxu0 0.0
    %978 = vmatpush.msra.mxu0 0.0
    %979 = vmatpush.msra.mxu0 %v397
    %980 = vmatpush.msra.mxu0 %v394
    %981 = vmatmul.f32.gmra.mxu0 %v960
    %v982 = vpop.f32.mrf.mxu0
    %v983 = vadd.f32 0.0, %v982
    %984 = vmatmul.f32.gmra.mxu0 %v963
    %v985 = vpop.f32.mrf.mxu0
    %v986 = vadd.f32 0.0, %v985
    %987 = vdwg.mxu0
    %v989 = vsel %vm666, %v837, 0
    %v992 = vsel %vm666, %v838, 0
    %994 = vmatpush.msra.mxu0 0.0
    %995 = vmatpush.msra.mxu0 0.0
    %996 = vmatpush.msra.mxu0 0.0
    %997 = vmatpush.msra.mxu0 0.0
    %998 = vmatpush.msra.mxu0 0.0
    %999 = vmatpush.msra.mxu0 0.0
    %1000 = vmatpush.msra.mxu0 0.0
    %1001 = vmatpush.msra.mxu0 0.0
    %1002 = vmatpush.msra.mxu0 0.0
    %1003 = vmatpush.msra.mxu0 0.0
    %1004 = vmatpush.msra.mxu0 0.0
    %1005 = vmatpush.msra.mxu0 0.0
    %1006 = vmatpush.msra.mxu0 0.0
    %1007 = vmatpush.msra.mxu0 0.0
    %1008 = vmatpush.msra.mxu0 %v403
    %1009 = vmatpush.msra.mxu0 %v400
    %1010 = vmatmul.f32.gmra.mxu0 %v989
    %v1011 = vpop.f32.mrf.mxu0
    %v1012 = vadd.f32 0.0, %v1011
    %1013 = vmatmul.f32.gmra.mxu0 %v992
    %v1014 = vpop.f32.mrf.mxu0
    %v1015 = vadd.f32 0.0, %v1014
    %1016 = vdwg.mxu0
    %v1018 = vsel %vm666, %v839, 0
    %v1021 = vsel %vm666, %v840, 0
    %1023 = vmatpush.msra.mxu0 0.0
    %1024 = vmatpush.msra.mxu0 0.0
    %1025 = vmatpush.msra.mxu0 0.0
    %1026 = vmatpush.msra.mxu0 0.0
    %1027 = vmatpush.msra.mxu0 0.0
    %1028 = vmatpush.msra.mxu0 0.0
    %1029 = vmatpush.msra.mxu0 0.0
    %1030 = vmatpush.msra.mxu0 0.0
    %1031 = vmatpush.msra.mxu0 0.0
    %1032 = vmatpush.msra.mxu0 0.0
    %1033 = vmatpush.msra.mxu0 0.0
    %1034 = vmatpush.msra.mxu0 0.0
    %1035 = vmatpush.msra.mxu0 0.0
    %1036 = vmatpush.msra.mxu0 0.0
    %1037 = vmatpush.msra.mxu0 %v426
    %1038 = vmatpush.msra.mxu0 %v423
    %1039 = vmatmul.f32.gmra.mxu0 %v1018
    %v1040 = vpop.f32.mrf.mxu0
    %v1041 = vadd.f32 0.0, %v1040
    %1042 = vmatmul.f32.gmra.mxu0 %v1021
    %v1043 = vpop.f32.mrf.mxu0
    %v1044 = vadd.f32 0.0, %v1043
    %1045 = vdwg.mxu0
    %v1047 = vsel %vm666, %v841, 0
    %v1050 = vsel %vm666, %v842, 0
    %1052 = vmatpush.msra.mxu0 0.0
    %1053 = vmatpush.msra.mxu0 0.0
    %1054 = vmatpush.msra.mxu0 0.0
    %1055 = vmatpush.msra.mxu0 0.0
    %1056 = vmatpush.msra.mxu0 0.0
    %1057 = vmatpush.msra.mxu0 0.0
    %1058 = vmatpush.msra.mxu0 0.0
    %1059 = vmatpush.msra.mxu0 0.0
    %1060 = vmatpush.msra.mxu0 0.0
    %1061 = vmatpush.msra.mxu0 0.0
    %1062 = vmatpush.msra.mxu0 0.0
    %1063 = vmatpush.msra.mxu0 0.0
    %1064 = vmatpush.msra.mxu0 0.0
    %1065 = vmatpush.msra.mxu0 0.0
    %1066 = vmatpush.msra.mxu0 %v432
    %1067 = vmatpush.msra.mxu0 %v429
    %1068 = vmatmul.f32.gmra.mxu0 %v1047
    %v1069 = vpop.f32.mrf.mxu0
    %v1070 = vadd.f32 0.0, %v1069
    %1071 = vmatmul.f32.gmra.mxu0 %v1050
    %v1072 = vpop.f32.mrf.mxu0
    %v1073 = vadd.f32 0.0, %v1072
    %1074 = vdwg.mxu0
    %v1075 = vsel %vm48, %v867, 0.0
    %v1076 = vsel %vm48, %v925, 0.0
    %v1077 = vadd.f32 %v1075, %v1076
    %v1078 = vsel %vm48, %v983, 0.0
    %v1079 = vadd.f32 %v1077, %v1078
    %v1080 = vsel %vm48, %v1041, 0.0
    %v1081 = vadd.f32 %v1079, %v1080
    %v1082 = vsel %vm48, %v870, 0.0
    %v1083 = vsel %vm48, %v928, 0.0
    %v1084 = vadd.f32 %v1082, %v1083
    %v1085 = vsel %vm48, %v986, 0.0
    %v1086 = vadd.f32 %v1084, %v1085
    %v1087 = vsel %vm48, %v1044, 0.0
    %v1088 = vadd.f32 %v1086, %v1087
    %v1089 = vsel %vm48, %v896, 0.0
    %v1090 = vsel %vm48, %v954, 0.0
    %v1091 = vadd.f32 %v1089, %v1090
    %v1092 = vsel %vm48, %v1012, 0.0
    %v1093 = vadd.f32 %v1091, %v1092
    %v1094 = vsel %vm48, %v1070, 0.0
    %v1095 = vadd.f32 %v1093, %v1094
    %v1096 = vsel %vm48, %v899, 0.0
    %v1097 = vsel %vm48, %v957, 0.0
    %v1098 = vadd.f32 %v1096, %v1097
    %v1099 = vsel %vm48, %v1015, 0.0
    %v1100 = vadd.f32 %v1098, %v1099
    %v1101 = vsel %vm48, %v1073, 0.0
    %v1102 = vadd.f32 %v1100, %v1101
    %v1103 = vld [vmem:[%s5] sm:$0x1]
    %v1105 = vperm.slane %v1103, 0
    %v1107 = vadd.f32 %v1081, %v1105
    %v1108 = vadd.f32 %v1088, %v1105
    %v1109 = vadd.f32 %v1095, %v1105
    %v1110 = vadd.f32 %v1102, %v1105
    %v1111 = vadd.f32 %v42, %v1107
    %v1112 = vadd.f32 %v43, %v1108
    %v1113 = vadd.f32 %v44, %v1109
    %v1114 = vadd.f32 %v45, %v1110
    %v1115 = vld [vmem:[%s6] sm:$0x1]
    %v1116 = vld [vmem:[%s7] sm:$0x1]
    %v1117 = vsel %vm48, %v1111, 0.0
    %1118 = vadd.xlane.f32.xlu0 %v1117
    %v1119 = vpop.xlane.xlu0 %1118
    %v1120 = vsel %vm48, %v1112, 0.0
    %1121 = vadd.xlane.f32.xlu0 %v1120
    %v1122 = vpop.xlane.xlu0 %1121
    %v1123 = vsel %vm48, %v1113, 0.0
    %1124 = vadd.xlane.f32.xlu0 %v1123
    %v1125 = vpop.xlane.xlu0 %1124
    %v1126 = vsel %vm48, %v1114, 0.0
    %1127 = vadd.xlane.f32.xlu0 %v1126
    %v1128 = vpop.xlane.xlu0 %1127
    %v1129 = vmul.f32 %v1119, %v67
    %v1130 = vmul.f32 %v1122, %v67
    %v1131 = vmul.f32 %v1125, %v67
    %v1132 = vmul.f32 %v1128, %v67
    %v1133 = vsub.f32 %v1111, %v1129
    %v1134 = vsub.f32 %v1112, %v1130
    %v1135 = vsub.f32 %v1113, %v1131
    %v1136 = vsub.f32 %v1114, %v1132
    %v1137 = vmul.f32 %v1133, %v1133
    %v1138 = vmul.f32 %v1134, %v1134
    %v1139 = vmul.f32 %v1135, %v1135
    %v1140 = vmul.f32 %v1136, %v1136
    %v1141 = vsel %vm48, %v1137, 0.0
    %1142 = vadd.xlane.f32.xlu0 %v1141
    %v1143 = vpop.xlane.xlu0 %1142
    %v1144 = vsel %vm48, %v1138, 0.0
    %1145 = vadd.xlane.f32.xlu0 %v1144
    %v1146 = vpop.xlane.xlu0 %1145
    %v1147 = vsel %vm48, %v1139, 0.0
    %1148 = vadd.xlane.f32.xlu0 %v1147
    %v1149 = vpop.xlane.xlu0 %1148
    %v1150 = vsel %vm48, %v1140, 0.0
    %1151 = vadd.xlane.f32.xlu0 %v1150
    %v1152 = vpop.xlane.xlu0 %1151
    %v1153 = vmul.f32 %v1143, %v67
    %v1154 = vmul.f32 %v1146, %v67
    %v1155 = vmul.f32 %v1149, %v67
    %v1156 = vmul.f32 %v1152, %v67
    %v1157 = vadd.f32 %v1153, 1e-05
    %v1158 = vadd.f32 %v1154, 1e-05
    %v1159 = vadd.f32 %v1155, 1e-05
    %v1160 = vadd.f32 %v1156, 1e-05
    %v1161 = vrsqrt.pop %v1157
    %v1162 = vmul.f32 %v1161, %v1157
    %v1163 = vmul.f32 %v1162, %v1161
    %v1164 = vmul.f32 0.5, %v1163
    %v1165 = vsub.f32 1.5, %v1164
    %v1166 = vmul.f32 %v1161, %v1165
    %vm1167 = vweird.f32 %v1157
    %vm1168 = vweird.f32 %v1161
    %vm1169 = vmor %vm1167, %vm1168
    %v1170 = vsel %vm1169, %v1161, %v1166
    %v1171 = vrsqrt.pop %v1158
    %v1172 = vmul.f32 %v1171, %v1158
    %v1173 = vmul.f32 %v1172, %v1171
    %v1174 = vmul.f32 0.5, %v1173
    %v1175 = vsub.f32 1.5, %v1174
    %v1176 = vmul.f32 %v1171, %v1175
    %vm1177 = vweird.f32 %v1158
    %vm1178 = vweird.f32 %v1171
    %vm1179 = vmor %vm1177, %vm1178
    %v1180 = vsel %vm1179, %v1171, %v1176
    %v1181 = vrsqrt.pop %v1159
    %v1182 = vmul.f32 %v1181, %v1159
    %v1183 = vmul.f32 %v1182, %v1181
    %v1184 = vmul.f32 0.5, %v1183
    %v1185 = vsub.f32 1.5, %v1184
    %v1186 = vmul.f32 %v1181, %v1185
    %vm1187 = vweird.f32 %v1159
    %vm1188 = vweird.f32 %v1181
    %vm1189 = vmor %vm1187, %vm1188
    %v1190 = vsel %vm1189, %v1181, %v1186
    %v1191 = vrsqrt.pop %v1160
    %v1192 = vmul.f32 %v1191, %v1160
    %v1193 = vmul.f32 %v1192, %v1191
    %v1194 = vmul.f32 0.5, %v1193
    %v1195 = vsub.f32 1.5, %v1194
    %v1196 = vmul.f32 %v1191, %v1195
    %vm1197 = vweird.f32 %v1160
    %vm1198 = vweird.f32 %v1191
    %vm1199 = vmor %vm1197, %vm1198
    %v1200 = vsel %vm1199, %v1191, %v1196
    %v1201 = vmul.f32 %v1133, %v1170
    %v1202 = vmul.f32 %v1134, %v1180
    %v1203 = vmul.f32 %v1135, %v1190
    %v1204 = vmul.f32 %v1136, %v1200
    %v1206 = vperm.slane %v1115, 0
    %v1208 = vmul.f32 %v1201, %v1206
    %v1209 = vmul.f32 %v1202, %v1206
    %v1210 = vmul.f32 %v1203, %v1206
    %v1211 = vmul.f32 %v1204, %v1206
    %v1213 = vperm.slane %v1116, 0
    %v1215 = vadd.f32 %v1208, %v1213
    %v1216 = vadd.f32 %v1209, %v1213
    %v1217 = vadd.f32 %v1210, %v1213
    %v1218 = vadd.f32 %v1211, %v1213
    %v1219 = vld [vmem:[%s8] sm:$0xff]
    %v1220 = vld [vmem:[%s8 + $0x8] sm:$0xff]
    %v1221 = vld [vmem:[%s8 + $0x10] sm:$0xff]
    %v1222 = vld [vmem:[%s8 + $0x18] sm:$0xff]
    %v1223 = vld [vmem:[%s9] sm:$0x1]
    %v1225 = vperm.slane %v1223, 0
    %v1228 = vsel %vm48, %v1215, 0
    %v1231 = vsel %vm48, %v1216, 0
    %v1234 = vsel %vm48, %v1217, 0
    %v1237 = vsel %vm48, %v1218, 0
    %1239 = vmatpush.msra.mxu0 0.0
    %1240 = vmatpush.msra.mxu0 0.0
    %1241 = vmatpush.msra.mxu0 0.0
    %1242 = vmatpush.msra.mxu0 0.0
    %1243 = vmatpush.msra.mxu0 0.0
    %1244 = vmatpush.msra.mxu0 0.0
    %1245 = vmatpush.msra.mxu0 0.0
    %1246 = vmatpush.msra.mxu0 0.0
    %1247 = vmatpush.msra.mxu0 0.0
    %1248 = vmatpush.msra.mxu0 0.0
    %1249 = vmatpush.msra.mxu0 0.0
    %1250 = vmatpush.msra.mxu0 0.0
    %1251 = vmatpush.msra.mxu0 %v1222
    %1252 = vmatpush.msra.mxu0 %v1221
    %1253 = vmatpush.msra.mxu0 %v1220
    %1254 = vmatpush.msra.mxu0 %v1219
    %1255 = vmatmul.f32.gmra.mxu0 %v1228
    %v1256 = vpop.f32.mrf.mxu0
    %v1257 = vadd.f32 %v1225, %v1256
    %1258 = vmatmul.f32.gmra.mxu0 %v1231
    %v1259 = vpop.f32.mrf.mxu0
    %v1260 = vadd.f32 %v1225, %v1259
    %1261 = vmatmul.f32.gmra.mxu0 %v1234
    %v1262 = vpop.f32.mrf.mxu0
    %v1263 = vadd.f32 %v1225, %v1262
    %1264 = vmatmul.f32.gmra.mxu0 %v1237
    %v1265 = vpop.f32.mrf.mxu0
    %v1266 = vadd.f32 %v1225, %v1265
    %1267 = vdwg.mxu0
    %v1268 = vmul.f32 %v1257, 0.5
    %v1269 = vmul.f32 %v1260, 0.5
    %v1270 = vmul.f32 %v1263, 0.5
    %v1271 = vmul.f32 %v1266, 0.5
    %v1272 = vmul.f32 %v1257, 0.70710677
    %v1273 = vmul.f32 %v1260, 0.70710677
    %v1274 = vmul.f32 %v1263, 0.70710677
    %v1275 = vmul.f32 %v1266, 0.70710677
    %v1276 = vmul.f32 %v1272, %v1272
    %v1277 = vmin.f32 16.0, %v1276
    %v1278 = vmul.f32 %v1277, 2.1237322e-06
    %v1279 = vadd.f32 %v1278, 0.00028619796
    %v1280 = vmul.f32 %v1277, %v1279
    %v1281 = vadd.f32 %v1280, 0.0036580483
    %v1282 = vmul.f32 %v1277, %v1281
    %v1283 = vadd.f32 %v1282, 0.05243302
    %v1284 = vmul.f32 %v1277, %v1283
    %v1285 = vadd.f32 %v1284, 0.18741608
    %v1286 = vmul.f32 %v1277, %v1285
    %v1287 = vadd.f32 %v1286, 1.1283791
    %v1288 = vmul.f32 %v1272, %v1287
    %v1289 = vmul.f32 %v1277, 3.8918573e-05
    %v1290 = vadd.f32 %v1289, 0.001143296
    %v1291 = vmul.f32 %v1277, %v1290
    %v1292 = vadd.f32 %v1291, 0.014752088
    %v1293 = vmul.f32 %v1277, %v1292
    %v1294 = vadd.f32 %v1293, 0.112945676
    %v1295 = vmul.f32 %v1277, %v1294
    %v1296 = vadd.f32 %v1295, 0.4994258
    %v1297 = vmul.f32 %v1277, %v1296
    %v1298 = vadd.f32 %v1297, 1.0
    %v1299 = vrcp.pop %v1298
    %v1300 = vmul.f32 %v1298, %v1299
    %v1301 = vsub.f32 1.0, %v1300
    %v1302 = vmul.f32 %v1299, %v1301
    %v1303 = vadd.f32 %v1299, %v1302
    %vm1304 = vweird.f32 %v1298
    %vm1305 = vweird.f32 %v1299
    %vm1306 = vmor %vm1304, %vm1305
    %v1307 = vsel %vm1306, %v1299, %v1303
    %v1308 = vand.u32 2147483647, %v1298
    %vm1309 = vcmp.eq.f32.partialorder %v1308, 8.507059e+37
    %v1310 = vand.u32 %v1298, 2147483648
    %v1311 = vor.u32 1.1754944e-38, %v1310
    %v1312 = vsel %vm1309, %v1311, %v1307
    %v1313 = vmul.f32 %v1288, %v1312
    %v1314 = vmin.f32 %v1313, 1.0
    %v1315 = vmax.f32 %v1314, -1.0
    %v1316 = vmul.f32 %v1273, %v1273
    %v1317 = vmin.f32 16.0, %v1316
    %v1318 = vmul.f32 %v1317, 2.1237322e-06
    %v1319 = vadd.f32 %v1318, 0.00028619796
    %v1320 = vmul.f32 %v1317, %v1319
    %v1321 = vadd.f32 %v1320, 0.0036580483
    %v1322 = vmul.f32 %v1317, %v1321
    %v1323 = vadd.f32 %v1322, 0.05243302
    %v1324 = vmul.f32 %v1317, %v1323
    %v1325 = vadd.f32 %v1324, 0.18741608
    %v1326 = vmul.f32 %v1317, %v1325
    %v1327 = vadd.f32 %v1326, 1.1283791
    %v1328 = vmul.f32 %v1273, %v1327
    %v1329 = vmul.f32 %v1317, 3.8918573e-05
    %v1330 = vadd.f32 %v1329, 0.001143296
    %v1331 = vmul.f32 %v1317, %v1330
    %v1332 = vadd.f32 %v1331, 0.014752088
    %v1333 = vmul.f32 %v1317, %v1332
    %v1334 = vadd.f32 %v1333, 0.112945676
    %v1335 = vmul.f32 %v1317, %v1334
    %v1336 = vadd.f32 %v1335, 0.4994258
    %v1337 = vmul.f32 %v1317, %v1336
    %v1338 = vadd.f32 %v1337, 1.0
    %v1339 = vrcp.pop %v1338
    %v1340 = vmul.f32 %v1338, %v1339
    %v1341 = vsub.f32 1.0, %v1340
    %v1342 = vmul.f32 %v1339, %v1341
    %v1343 = vadd.f32 %v1339, %v1342
    %vm1344 = vweird.f32 %v1338
    %vm1345 = vweird.f32 %v1339
    %vm1346 = vmor %vm1344, %vm1345
    %v1347 = vsel %vm1346, %v1339, %v1343
    %v1348 = vand.u32 2147483647, %v1338
    %vm1349 = vcmp.eq.f32.partialorder %v1348, 8.507059e+37
    %v1350 = vand.u32 %v1338, 2147483648
    %v1351 = vor.u32 1.1754944e-38, %v1350
    %v1352 = vsel %vm1349, %v1351, %v1347
    %v1353 = vmul.f32 %v1328, %v1352
    %v1354 = vmin.f32 %v1353, 1.0
    %v1355 = vmax.f32 %v1354, -1.0
    %v1356 = vmul.f32 %v1274, %v1274
    %v1357 = vmin.f32 16.0, %v1356
    %v1358 = vmul.f32 %v1357, 2.1237322e-06
    %v1359 = vadd.f32 %v1358, 0.00028619796
    %v1360 = vmul.f32 %v1357, %v1359
    %v1361 = vadd.f32 %v1360, 0.0036580483
    %v1362 = vmul.f32 %v1357, %v1361
    %v1363 = vadd.f32 %v1362, 0.05243302
    %v1364 = vmul.f32 %v1357, %v1363
    %v1365 = vadd.f32 %v1364, 0.18741608
    %v1366 = vmul.f32 %v1357, %v1365
    %v1367 = vadd.f32 %v1366, 1.1283791
    %v1368 = vmul.f32 %v1274, %v1367
    %v1369 = vmul.f32 %v1357, 3.8918573e-05
    %v1370 = vadd.f32 %v1369, 0.001143296
    %v1371 = vmul.f32 %v1357, %v1370
    %v1372 = vadd.f32 %v1371, 0.014752088
    %v1373 = vmul.f32 %v1357, %v1372
    %v1374 = vadd.f32 %v1373, 0.112945676
    %v1375 = vmul.f32 %v1357, %v1374
    %v1376 = vadd.f32 %v1375, 0.4994258
    %v1377 = vmul.f32 %v1357, %v1376
    %v1378 = vadd.f32 %v1377, 1.0
    %v1379 = vrcp.pop %v1378
    %v1380 = vmul.f32 %v1378, %v1379
    %v1381 = vsub.f32 1.0, %v1380
    %v1382 = vmul.f32 %v1379, %v1381
    %v1383 = vadd.f32 %v1379, %v1382
    %vm1384 = vweird.f32 %v1378
    %vm1385 = vweird.f32 %v1379
    %vm1386 = vmor %vm1384, %vm1385
    %v1387 = vsel %vm1386, %v1379, %v1383
    %v1388 = vand.u32 2147483647, %v1378
    %vm1389 = vcmp.eq.f32.partialorder %v1388, 8.507059e+37
    %v1390 = vand.u32 %v1378, 2147483648
    %v1391 = vor.u32 1.1754944e-38, %v1390
    %v1392 = vsel %vm1389, %v1391, %v1387
    %v1393 = vmul.f32 %v1368, %v1392
    %v1394 = vmin.f32 %v1393, 1.0
    %v1395 = vmax.f32 %v1394, -1.0
    %v1396 = vmul.f32 %v1275, %v1275
    %v1397 = vmin.f32 16.0, %v1396
    %v1398 = vmul.f32 %v1397, 2.1237322e-06
    %v1399 = vadd.f32 %v1398, 0.00028619796
    %v1400 = vmul.f32 %v1397, %v1399
    %v1401 = vadd.f32 %v1400, 0.0036580483
    %v1402 = vmul.f32 %v1397, %v1401
    %v1403 = vadd.f32 %v1402, 0.05243302
    %v1404 = vmul.f32 %v1397, %v1403
    %v1405 = vadd.f32 %v1404, 0.18741608
    %v1406 = vmul.f32 %v1397, %v1405
    %v1407 = vadd.f32 %v1406, 1.1283791
    %v1408 = vmul.f32 %v1275, %v1407
    %v1409 = vmul.f32 %v1397, 3.8918573e-05
    %v1410 = vadd.f32 %v1409, 0.001143296
    %v1411 = vmul.f32 %v1397, %v1410
    %v1412 = vadd.f32 %v1411, 0.014752088
    %v1413 = vmul.f32 %v1397, %v1412
    %v1414 = vadd.f32 %v1413, 0.112945676
    %v1415 = vmul.f32 %v1397, %v1414
    %v1416 = vadd.f32 %v1415, 0.4994258
    %v1417 = vmul.f32 %v1397, %v1416
    %v1418 = vadd.f32 %v1417, 1.0
    %v1419 = vrcp.pop %v1418
    %v1420 = vmul.f32 %v1418, %v1419
    %v1421 = vsub.f32 1.0, %v1420
    %v1422 = vmul.f32 %v1419, %v1421
    %v1423 = vadd.f32 %v1419, %v1422
    %vm1424 = vweird.f32 %v1418
    %vm1425 = vweird.f32 %v1419
    %vm1426 = vmor %vm1424, %vm1425
    %v1427 = vsel %vm1426, %v1419, %v1423
    %v1428 = vand.u32 2147483647, %v1418
    %vm1429 = vcmp.eq.f32.partialorder %v1428, 8.507059e+37
    %v1430 = vand.u32 %v1418, 2147483648
    %v1431 = vor.u32 1.1754944e-38, %v1430
    %v1432 = vsel %vm1429, %v1431, %v1427
    %v1433 = vmul.f32 %v1408, %v1432
    %v1434 = vmin.f32 %v1433, 1.0
    %v1435 = vmax.f32 %v1434, -1.0
    %v1436 = vadd.f32 %v1315, 1.0
    %v1437 = vadd.f32 %v1355, 1.0
    %v1438 = vadd.f32 %v1395, 1.0
    %v1439 = vadd.f32 %v1435, 1.0
    %v1440 = vmul.f32 %v1268, %v1436
    %v1441 = vmul.f32 %v1269, %v1437
    %v1442 = vmul.f32 %v1270, %v1438
    %v1443 = vmul.f32 %v1271, %v1439
    %v1444 = vld [vmem:[%s10] sm:$0xff]
    %v1445 = vld [vmem:[%s10 + $0x8] sm:$0xff]
    %v1446 = vld [vmem:[%s10 + $0x10] sm:$0xff]
    %v1447 = vld [vmem:[%s10 + $0x18] sm:$0xff]
    %v1448 = vld [vmem:[%s10 + $0x20] sm:$0xff]
    %v1449 = vld [vmem:[%s10 + $0x28] sm:$0xff]
    %v1450 = vld [vmem:[%s10 + $0x30] sm:$0xff]
    %v1451 = vld [vmem:[%s10 + $0x38] sm:$0xff]
    %v1452 = vld [vmem:[%s10 + $0x40] sm:$0xff]
    %v1453 = vld [vmem:[%s10 + $0x48] sm:$0xff]
    %v1454 = vld [vmem:[%s10 + $0x50] sm:$0xff]
    %v1455 = vld [vmem:[%s10 + $0x58] sm:$0xff]
    %v1456 = vld [vmem:[%s10 + $0x60] sm:$0xff]
    %v1457 = vld [vmem:[%s10 + $0x68] sm:$0xff]
    %v1458 = vld [vmem:[%s10 + $0x70] sm:$0xff]
    %v1459 = vld [vmem:[%s10 + $0x78] sm:$0xff]
    %v1460 = vld [vmem:[%s11] sm:$0x1]
    %v1462 = vperm.slane %v1460, 0
    %1464 = vmatpush.msra.mxu0 %v1459
    %1465 = vmatpush.msra.mxu0 %v1458
    %1466 = vmatpush.msra.mxu0 %v1457
    %1467 = vmatpush.msra.mxu0 %v1456
    %1468 = vmatpush.msra.mxu0 %v1455
    %1469 = vmatpush.msra.mxu0 %v1454
    %1470 = vmatpush.msra.mxu0 %v1453
    %1471 = vmatpush.msra.mxu0 %v1452
    %1472 = vmatpush.msra.mxu0 %v1451
    %1473 = vmatpush.msra.mxu0 %v1450
    %1474 = vmatpush.msra.mxu0 %v1449
    %1475 = vmatpush.msra.mxu0 %v1448
    %1476 = vmatpush.msra.mxu0 %v1447
    %1477 = vmatpush.msra.mxu0 %v1446
    %1478 = vmatpush.msra.mxu0 %v1445
    %1479 = vmatpush.msra.mxu0 %v1444
    %1480 = vmatmul.f32.gmra.mxu0 %v1440
    %v1481 = vpop.f32.mrf.mxu0
    %v1482 = vadd.f32 %v1462, %v1481
    %1483 = vmatmul.f32.gmra.mxu0 %v1441
    %v1484 = vpop.f32.mrf.mxu0
    %v1485 = vadd.f32 %v1462, %v1484
    %1486 = vmatmul.f32.gmra.mxu0 %v1442
    %v1487 = vpop.f32.mrf.mxu0
    %v1488 = vadd.f32 %v1462, %v1487
    %1489 = vmatmul.f32.gmra.mxu0 %v1443
    %v1490 = vpop.f32.mrf.mxu0
    %v1491 = vadd.f32 %v1462, %v1490
    %1492 = vdwg.mxu0
    %v1493 = vadd.f32 %v1111, %v1482
    %v1494 = vadd.f32 %v1112, %v1485
    %v1495 = vadd.f32 %v1113, %v1488
    %v1496 = vadd.f32 %v1114, %v1491
    %1497 = vst.msk [vmem:[#allocation2] sm:$0xff] %vm48, %v1493
    %1498 = vst.msk [vmem:[#allocation2 + $0x8] sm:$0xff] %vm48, %v1494
    %1499 = vst.msk [vmem:[#allocation2 + $0x10] sm:$0xff] %vm48, %v1495
    %1500 = vst.msk [vmem:[#allocation2 + $0x18] sm:$0xff] %vm48, %v1496
    // Predicated region
    $region50: #{transformer_block.1} parent=1 // pred_check
      _
    $region51: #{transformer_block.1} parent=1 // pred_check_branch
      %1502 = sbr.rel (0) target = $region53
    $region52: #{transformer_block.1} parent=1 // pred_region
      %1504 = vsyncadd [#allocation3], 0
      %s1505 = sshll.u32 [#allocation2], 4
      %s1506 = int_to_ptr.vmem [resolvable:$true] %s1505
      %s1507 = sshll.u32 %s12, 4
      %s1508 = int_to_ptr.hbm [resolvable:$true] %s1507
      %1513 = dma.vmem_to_hbm [thread:$0]  %s1506, 512, %s1508, [#allocation3], 128, 128, 8
    $region53: #{transformer_block.1} parent=1 // pred_fallthru
      _
    // Predicated region
    $region54: #{transformer_block.1} parent=1 // pred_check
      _
    $region55: #{transformer_block.1} parent=1 // pred_check_branch
      %1515 = sbr.rel (0) target = $region57
    $region56: #{transformer_block.1} parent=1 // pred_region
      %1517 = dma.done [#allocation3], 512
    $region57: #{transformer_block.1} parent=1 // pred_fallthru
      _
    %1518 = vsyncpa [#allocation3], 1

</llo_original>
